<compile_context>
chip_gen: v7x
topology: tpu7x:2x2x1
jax: 0.10.0
libtpu: 0.0.40
codegen_flags: <defaults>
</compile_context>

<pallas_src>
import numpy as np
import jax
import jax.numpy as jnp
from jax.experimental import pallas as pl
from jax.experimental.pallas import tpu as pltpu


def _bnn_kernel(idx_ref,                       # scalar-prefetch (used by index_maps only)
                s_ref, a_ref,                  # streamed batch tiles
                w1s_ref, w1a_ref, b1_ref,      # selected member's weights (VMEM-resident)
                w2_ref, b2_ref, w3_ref, b3_ref,
                o_ref):
    del idx_ref  # consumed by the BlockSpec index_maps, not by the body
    cdt = w1s_ref.dtype                        # compute dtype (f32 or bf16)

    s = s_ref[...].astype(cdt)
    a = a_ref[...].astype(cdt)

    # Layer 1 (normalization already folded into W1/b1).
    h1 = (jnp.dot(s, w1s_ref[...], preferred_element_type=jnp.float32)
          + jnp.dot(a, w1a_ref[...], preferred_element_type=jnp.float32)
          + b1_ref[...].astype(jnp.float32))
    h1 = jnp.maximum(h1, 0.0)

    # Layer 2
    h2 = (jnp.dot(h1.astype(cdt), w2_ref[...], preferred_element_type=jnp.float32)
          + b2_ref[...].astype(jnp.float32))
    h2 = jnp.maximum(h2, 0.0)

    # Output layer
    out = (jnp.dot(h2.astype(cdt), w3_ref[...], preferred_element_type=jnp.float32)
           + b3_ref[...].astype(jnp.float32))
    o_ref[...] = out.astype(o_ref.dtype)


def fold_norm_into_params(params, norm_mean, norm_std, state_dim,
                          compute_dtype=jnp.bfloat16):
    """set_norm() equivalent, done once: fold (x - mean)/std into W1/b1 and
    split W1 over the states/actions inputs (removes the runtime concat)."""
    mean = jnp.asarray(norm_mean, jnp.float32).reshape(-1)     # [in_dim]
    std = jnp.asarray(norm_std, jnp.float32).reshape(-1)       # [in_dim]
    inv_std = 1.0 / std                                        # divide happens once, offline

    w1 = jnp.asarray(params["w1"], jnp.float32)                # [P, in_dim, H]
    b1 = jnp.asarray(params["b1"], jnp.float32)                # [P, 1, H]
    w1_folded = w1 * inv_std[None, :, None]
    b1_folded = b1 - jnp.einsum("d,pdh->ph", mean * inv_std, w1)[:, None, :]

    return {
        "w1_s": w1_folded[:, :state_dim, :].astype(compute_dtype),
        "w1_a": w1_folded[:, state_dim:, :].astype(compute_dtype),
        "b1": b1_folded.astype(jnp.float32),
        "w2": jnp.asarray(params["w2"]).astype(compute_dtype),
        "b2": jnp.asarray(params["b2"]).astype(jnp.float32),
        "w3": jnp.asarray(params["w3"]).astype(compute_dtype),
        "b3": jnp.asarray(params["b3"]).astype(jnp.float32),
    }


def ensemble_forward(states, actions, folded_params, model_idx, *, block_b=1024):
    """Run the selected ensemble member's BNN forward in one Pallas kernel.

    states:  [B, state_dim] f32
    actions: [B, act_dim]   f32
    folded_params: output of fold_norm_into_params (leading dim = pop_size)
    model_idx: int (the randomly chosen member, like np.random.randint)
    """
    B, state_dim = states.shape
    _, act_dim = actions.shape
    H = folded_params["w2"].shape[-1]
    out_dim = folded_params["w3"].shape[-1]

    # Batch tile: as large as requested but never larger than B, and kept a
    # multiple of 8 (sublane alignment) when it is not the full batch.
    bt = min(B, int(block_b))
    if bt != B:
        bt = max(8, (bt // 8) * 8)
    grid = (pl.cdiv(B, bt),)

    idx = jnp.asarray(model_idx, dtype=jnp.int32).reshape((1,))

    # Streamed tiles follow the batch program id; weight blocks ignore it so
    # the selected member's weights stay resident in VMEM across all tiles
    # (Pallas skips re-DMA when the block index does not change).
    grid_spec = pltpu.PrefetchScalarGridSpec(
        num_scalar_prefetch=1,
        grid=grid,
        in_specs=[
            pl.BlockSpec((bt, state_dim), lambda i, idx: (i, 0)),               # states
            pl.BlockSpec((bt, act_dim),   lambda i, idx: (i, 0)),               # actions
            pl.BlockSpec((None, state_dim, H), lambda i, idx: (idx[0], 0, 0)),  # W1_s
            pl.BlockSpec((None, act_dim, H),   lambda i, idx: (idx[0], 0, 0)),  # W1_a
            pl.BlockSpec((None, 1, H),         lambda i, idx: (idx[0], 0, 0)),  # b1
            pl.BlockSpec((None, H, H),         lambda i, idx: (idx[0], 0, 0)),  # W2
            pl.BlockSpec((None, 1, H),         lambda i, idx: (idx[0], 0, 0)),  # b2
            pl.BlockSpec((None, H, out_dim),   lambda i, idx: (idx[0], 0, 0)),  # W3
            pl.BlockSpec((None, 1, out_dim),   lambda i, idx: (idx[0], 0, 0)),  # b3
        ],
        out_specs=pl.BlockSpec((bt, out_dim), lambda i, idx: (i, 0)),
    )

    return pl.pallas_call(
        _bnn_kernel,
        out_shape=jax.ShapeDtypeStruct((B, out_dim), jnp.float32),
        grid_spec=grid_spec,
        compiler_params=pltpu.CompilerParams(
            # batch tiles are independent -> megacore sharding on v7x
            dimension_semantics=("parallel",),
            # explicit, generation-safe scoped-VMEM budget (<= 64 MiB physical on v7x)
            vmem_limit_bytes=32 * 1024 * 1024,
        ),
    )(idx, states, actions,
      folded_params["w1_s"], folded_params["w1_a"], folded_params["b1"],
      folded_params["w2"], folded_params["b2"],
      folded_params["w3"], folded_params["b3"])


def _init_ensemble_params(key, pop_size, in_dim, hidden, out_dim):
    ks = jax.random.split(key, 6)

    def g(k, shape, scale):
        return jax.random.normal(k, shape, dtype=jnp.float32) * scale

    return {
        "w1": g(ks[0], (pop_size, in_dim, hidden), 1.0 / np.sqrt(in_dim)),
        "b1": g(ks[1], (pop_size, 1, hidden), 0.01),
        "w2": g(ks[2], (pop_size, hidden, hidden), 1.0 / np.sqrt(hidden)),
        "b2": g(ks[3], (pop_size, 1, hidden), 0.01),
        "w3": g(ks[4], (pop_size, hidden, out_dim), 1.0 / np.sqrt(hidden)),
        "b3": g(ks[5], (pop_size, 1, out_dim), 0.01),
    }


def _reference_forward(states, actions, params, mean, std, i):
    x = np.concatenate([np.asarray(states), np.asarray(actions)], axis=-1).astype(np.float32)
    x = (x - np.asarray(mean)) / np.asarray(std)
    w1, b1 = np.asarray(params["w1"])[i], np.asarray(params["b1"])[i]
    w2, b2 = np.asarray(params["w2"])[i], np.asarray(params["b2"])[i]
    w3, b3 = np.asarray(params["w3"])[i], np.asarray(params["b3"])[i]
    h1 = np.maximum(x @ w1 + b1, 0.0)
    h2 = np.maximum(h1 @ w2 + b2, 0.0)
    return h2 @ w3 + b3


if __name__ == "__main__":
    # Small, deterministic configuration (batch chosen so the grid has >1 tile).
    state_dim, act_dim = 12, 4
    pop_size, n_elites = 5, 2
    hidden = 32
    batch = 256
    block_b = 128
    in_dim = state_dim + act_dim

    key = jax.random.PRNGKey(0)
    k_states, k_actions, k_params, k_mean = jax.random.split(key, 4)

    states = jax.random.normal(k_states, (batch, state_dim), dtype=jnp.float32)
    actions = jax.random.normal(k_actions, (batch, act_dim), dtype=jnp.float32)

    params = _init_ensemble_params(k_params, pop_size, in_dim, hidden, state_dim)

    # set_norm(mean, std) equivalent — deterministic, std kept away from zero.
    norm_mean = jax.random.normal(k_mean, (1, in_dim), dtype=jnp.float32) * 0.1
    norm_std = jnp.ones((1, in_dim), dtype=jnp.float32)

    # forward(): i = np.random.randint(0, self.pop_size) — made deterministic here.
    rng = np.random.RandomState(0)
    model_idx = int(rng.randint(0, pop_size))

    ref = _reference_forward(states, actions, params, norm_mean, norm_std, model_idx)

    # f32 weight path: numerically tight check of the folded-norm kernel.
    p_f32 = fold_norm_into_params(params, norm_mean, norm_std, state_dim,
                                  compute_dtype=jnp.float32)
    pred_f32 = jax.block_until_ready(
        ensemble_forward(states, actions, p_f32, model_idx, block_b=block_b))
    np.testing.assert_allclose(np.asarray(pred_f32), ref, rtol=1e-4, atol=1e-4)

    # bf16 weight path (MXU-native on v6e/v7x, f32 accumulation) — looser tolerance.
    p_bf16 = fold_norm_into_params(params, norm_mean, norm_std, state_dim,
                                   compute_dtype=jnp.bfloat16)
    pred_bf16 = jax.block_until_ready(
        ensemble_forward(states, actions, p_bf16, model_idx, block_b=block_b))
    np.testing.assert_allclose(np.asarray(pred_bf16), ref, rtol=5e-2, atol=5e-2)

    print("KERNEL_OK")
</pallas_src>

<mosaic_0001>
module attributes {stable_mosaic.version = 11 : i64} {
  func.func @_bnn_kernel(%arg0: i32, %arg1: memref<1xi32, #tpu.memory_space<smem>>, %arg2: memref<128x12xf32, #tpu.memory_space<vmem>>, %arg3: memref<128x4xf32, #tpu.memory_space<vmem>>, %arg4: memref<1x12x32xf32, #tpu.memory_space<vmem>>, %arg5: memref<1x4x32xf32, #tpu.memory_space<vmem>>, %arg6: memref<1x1x32xf32, #tpu.memory_space<vmem>>, %arg7: memref<1x32x32xf32, #tpu.memory_space<vmem>>, %arg8: memref<1x1x32xf32, #tpu.memory_space<vmem>>, %arg9: memref<1x32x12xf32, #tpu.memory_space<vmem>>, %arg10: memref<1x1x12xf32, #tpu.memory_space<vmem>>, %arg11: memref<128x12xf32, #tpu.memory_space<vmem>>) attributes {dimension_semantics = [#tpu.dimension_semantics<parallel>], iteration_bounds = array<i64: 2>, scalar_prefetch = 1 : i64, scratch_operands = 0 : i64, tpu.core_type = #tpu.core_type<tc>, window_params = [{transform_indices = @transform_0, window_bounds = array<i64: 128, 12>}, {transform_indices = @transform_1, window_bounds = array<i64: 128, 4>}, {transform_indices = @transform_2, window_bounds = array<i64: 1, 12, 32>}, {transform_indices = @transform_3, window_bounds = array<i64: 1, 4, 32>}, {transform_indices = @transform_4, window_bounds = array<i64: 1, 1, 32>}, {transform_indices = @transform_5, window_bounds = array<i64: 1, 32, 32>}, {transform_indices = @transform_6, window_bounds = array<i64: 1, 1, 32>}, {transform_indices = @transform_7, window_bounds = array<i64: 1, 32, 12>}, {transform_indices = @transform_8, window_bounds = array<i64: 1, 1, 12>}, {transform_indices = @transform_9, window_bounds = array<i64: 128, 12>}]} {
    %c0 = arith.constant 0 : index
    %c0_0 = arith.constant 0 : index
    %0 = vector.load %arg2[%c0, %c0_0] : memref<128x12xf32, #tpu.memory_space<vmem>>, vector<128x12xf32>
    %c0_1 = arith.constant 0 : index
    %c0_2 = arith.constant 0 : index
    %1 = vector.load %arg3[%c0_1, %c0_2] : memref<128x4xf32, #tpu.memory_space<vmem>>, vector<128x4xf32>
    %c0_3 = arith.constant 0 : index
    %c0_4 = arith.constant 0 : index
    %c0_5 = arith.constant 0 : index
    %2 = vector.load %arg4[%c0_3, %c0_4, %c0_5] : memref<1x12x32xf32, #tpu.memory_space<vmem>>, vector<1x12x32xf32>
    %3 = vector.shape_cast %2 : vector<1x12x32xf32> to vector<12x32xf32>
    %cst = arith.constant dense<0.000000e+00> : vector<128x32xf32>
    %4 = tpu.matmul %0, %3, %cst {dimension_numbers = #tpu.dot_dimension_numbers<[1], [0], [0], [1], [0, 0, 1, 1], [], []>} : vector<128x12xf32>, vector<12x32xf32>, vector<128x32xf32> -> vector<128x32xf32>
    %c0_6 = arith.constant 0 : index
    %c0_7 = arith.constant 0 : index
    %c0_8 = arith.constant 0 : index
    %5 = vector.load %arg5[%c0_6, %c0_7, %c0_8] : memref<1x4x32xf32, #tpu.memory_space<vmem>>, vector<1x4x32xf32>
    %6 = vector.shape_cast %5 : vector<1x4x32xf32> to vector<4x32xf32>
    %cst_9 = arith.constant dense<0.000000e+00> : vector<128x32xf32>
    %7 = tpu.matmul %1, %6, %cst_9 {dimension_numbers = #tpu.dot_dimension_numbers<[1], [0], [0], [1], [0, 0, 1, 1], [], []>} : vector<128x4xf32>, vector<4x32xf32>, vector<128x32xf32> -> vector<128x32xf32>
    %8 = arith.addf %4, %7 : vector<128x32xf32>
    %c0_10 = arith.constant 0 : index
    %c0_11 = arith.constant 0 : index
    %c0_12 = arith.constant 0 : index
    %9 = vector.load %arg6[%c0_10, %c0_11, %c0_12] : memref<1x1x32xf32, #tpu.memory_space<vmem>>, vector<1x1x32xf32>
    %10 = vector.shape_cast %9 : vector<1x1x32xf32> to vector<1x32xf32>
    %11 = vector.broadcast %10 : vector<1x32xf32> to vector<128x32xf32>
    %12 = arith.addf %8, %11 : vector<128x32xf32>
    %cst_13 = arith.constant 0.000000e+00 : f32
    %13 = vector.broadcast %cst_13 : f32 to vector<128x32xf32>
    %14 = arith.maximumf %12, %13 : vector<128x32xf32>
    %c0_14 = arith.constant 0 : index
    %c0_15 = arith.constant 0 : index
    %c0_16 = arith.constant 0 : index
    %15 = vector.load %arg7[%c0_14, %c0_15, %c0_16] : memref<1x32x32xf32, #tpu.memory_space<vmem>>, vector<1x32x32xf32>
    %16 = vector.shape_cast %15 : vector<1x32x32xf32> to vector<32x32xf32>
    %cst_17 = arith.constant dense<0.000000e+00> : vector<128x32xf32>
    %17 = tpu.matmul %14, %16, %cst_17 {dimension_numbers = #tpu.dot_dimension_numbers<[1], [0], [0], [1], [0, 0, 1, 1], [], []>} : vector<128x32xf32>, vector<32x32xf32>, vector<128x32xf32> -> vector<128x32xf32>
    %c0_18 = arith.constant 0 : index
    %c0_19 = arith.constant 0 : index
    %c0_20 = arith.constant 0 : index
    %18 = vector.load %arg8[%c0_18, %c0_19, %c0_20] : memref<1x1x32xf32, #tpu.memory_space<vmem>>, vector<1x1x32xf32>
    %19 = vector.shape_cast %18 : vector<1x1x32xf32> to vector<1x32xf32>
    %20 = vector.broadcast %19 : vector<1x32xf32> to vector<128x32xf32>
    %21 = arith.addf %17, %20 : vector<128x32xf32>
    %cst_21 = arith.constant 0.000000e+00 : f32
    %22 = vector.broadcast %cst_21 : f32 to vector<128x32xf32>
    %23 = arith.maximumf %21, %22 : vector<128x32xf32>
    %c0_22 = arith.constant 0 : index
    %c0_23 = arith.constant 0 : index
    %c0_24 = arith.constant 0 : index
    %24 = vector.load %arg9[%c0_22, %c0_23, %c0_24] : memref<1x32x12xf32, #tpu.memory_space<vmem>>, vector<1x32x12xf32>
    %25 = vector.shape_cast %24 : vector<1x32x12xf32> to vector<32x12xf32>
    %cst_25 = arith.constant dense<0.000000e+00> : vector<128x12xf32>
    %26 = tpu.matmul %23, %25, %cst_25 {dimension_numbers = #tpu.dot_dimension_numbers<[1], [0], [0], [1], [0, 0, 1, 1], [], []>} : vector<128x32xf32>, vector<32x12xf32>, vector<128x12xf32> -> vector<128x12xf32>
    %c0_26 = arith.constant 0 : index
    %c0_27 = arith.constant 0 : index
    %c0_28 = arith.constant 0 : index
    %27 = vector.load %arg10[%c0_26, %c0_27, %c0_28] : memref<1x1x12xf32, #tpu.memory_space<vmem>>, vector<1x1x12xf32>
    %28 = vector.shape_cast %27 : vector<1x1x12xf32> to vector<1x12xf32>
    %29 = vector.broadcast %28 : vector<1x12xf32> to vector<128x12xf32>
    %30 = arith.addf %26, %29 : vector<128x12xf32>
    %c0_29 = arith.constant 0 : index
    %c0_30 = arith.constant 0 : index
    %31 = vector.load %arg11[%c0_29, %c0_30] : memref<128x12xf32, #tpu.memory_space<vmem>>, vector<128x12xf32>
    tpu.vector_store %arg11[%c0_29, %c0_30], %30 {strides = array<i32>} : memref<128x12xf32, #tpu.memory_space<vmem>>, vector<128x12xf32>,
    return
  }
  func.func @transform_0(%arg0: i32, %arg1: memref<1xi32, #tpu.memory_space<smem>>) -> (i32, i32) {
    %c0_i32 = arith.constant 0 : i32
    %c0_i32_0 = arith.constant 0 : i32
    return %arg0, %c0_i32 : i32, i32
  }
  func.func @transform_1(%arg0: i32, %arg1: memref<1xi32, #tpu.memory_space<smem>>) -> (i32, i32) {
    %c0_i32 = arith.constant 0 : i32
    %c0_i32_0 = arith.constant 0 : i32
    return %arg0, %c0_i32 : i32, i32
  }
  func.func @transform_2(%arg0: i32, %arg1: memref<1xi32, #tpu.memory_space<smem>>) -> (i32, i32, i32) {
    %c0 = arith.constant 0 : index
    %0 = memref.load %arg1[%c0] : memref<1xi32, #tpu.memory_space<smem>>
    %c0_i32 = arith.constant 0 : i32
    %c0_i32_0 = arith.constant 0 : i32
    %c0_i32_1 = arith.constant 0 : i32
    return %0, %c0_i32, %c0_i32_0 : i32, i32, i32
  }
  func.func @transform_3(%arg0: i32, %arg1: memref<1xi32, #tpu.memory_space<smem>>) -> (i32, i32, i32) {
    %c0 = arith.constant 0 : index
    %0 = memref.load %arg1[%c0] : memref<1xi32, #tpu.memory_space<smem>>
    %c0_i32 = arith.constant 0 : i32
    %c0_i32_0 = arith.constant 0 : i32
    %c0_i32_1 = arith.constant 0 : i32
    return %0, %c0_i32, %c0_i32_0 : i32, i32, i32
  }
  func.func @transform_4(%arg0: i32, %arg1: memref<1xi32, #tpu.memory_space<smem>>) -> (i32, i32, i32) {
    %c0 = arith.constant 0 : index
    %0 = memref.load %arg1[%c0] : memref<1xi32, #tpu.memory_space<smem>>
    %c0_i32 = arith.constant 0 : i32
    %c0_i32_0 = arith.constant 0 : i32
    %c0_i32_1 = arith.constant 0 : i32
    return %0, %c0_i32, %c0_i32_0 : i32, i32, i32
  }
  func.func @transform_5(%arg0: i32, %arg1: memref<1xi32, #tpu.memory_space<smem>>) -> (i32, i32, i32) {
    %c0 = arith.constant 0 : index
    %0 = memref.load %arg1[%c0] : memref<1xi32, #tpu.memory_space<smem>>
    %c0_i32 = arith.constant 0 : i32
    %c0_i32_0 = arith.constant 0 : i32
    %c0_i32_1 = arith.constant 0 : i32
    return %0, %c0_i32, %c0_i32_0 : i32, i32, i32
  }
  func.func @transform_6(%arg0: i32, %arg1: memref<1xi32, #tpu.memory_space<smem>>) -> (i32, i32, i32) {
    %c0 = arith.constant 0 : index
    %0 = memref.load %arg1[%c0] : memref<1xi32, #tpu.memory_space<smem>>
    %c0_i32 = arith.constant 0 : i32
    %c0_i32_0 = arith.constant 0 : i32
    %c0_i32_1 = arith.constant 0 : i32
    return %0, %c0_i32, %c0_i32_0 : i32, i32, i32
  }
  func.func @transform_7(%arg0: i32, %arg1: memref<1xi32, #tpu.memory_space<smem>>) -> (i32, i32, i32) {
    %c0 = arith.constant 0 : index
    %0 = memref.load %arg1[%c0] : memref<1xi32, #tpu.memory_space<smem>>
    %c0_i32 = arith.constant 0 : i32
    %c0_i32_0 = arith.constant 0 : i32
    %c0_i32_1 = arith.constant 0 : i32
    return %0, %c0_i32, %c0_i32_0 : i32, i32, i32
  }
  func.func @transform_8(%arg0: i32, %arg1: memref<1xi32, #tpu.memory_space<smem>>) -> (i32, i32, i32) {
    %c0 = arith.constant 0 : index
    %0 = memref.load %arg1[%c0] : memref<1xi32, #tpu.memory_space<smem>>
    %c0_i32 = arith.constant 0 : i32
    %c0_i32_0 = arith.constant 0 : i32
    %c0_i32_1 = arith.constant 0 : i32
    return %0, %c0_i32, %c0_i32_0 : i32, i32, i32
  }
  func.func @transform_9(%arg0: i32, %arg1: memref<1xi32, #tpu.memory_space<smem>>) -> (i32, i32) {
    %c0_i32 = arith.constant 0 : i32
    %c0_i32_0 = arith.constant 0 : i32
    return %arg0, %c0_i32 : i32, i32
  }
}

</mosaic_0001>

<llo_original>
// kernel: tpu_custom_call.1
$region0: #{tpu_custom_call.1}
  #allocation0 [shape = 'u32[]', space=smem, size = 0x4, offset = 0x4, fixed_abs, tag = 'smem constant byte address 0x4 - core index']
  #allocation1 [shape = 'u32[144,128]{1,0:T(1,128)}', space=vmem, size = 0x12000, scoped, tag = 'internal scratch']
  #allocation2 [shape = 's32[1]{0}', space=sflag, size = 0x4, scoped, tag = 'scoped memory for tpu_custom_call.1']
  #allocation3 [shape = 's32[1]{0:T(128)S(6)}', space=smem, size = 0x200, scoped, tag = 'prefetched SMEM operand 0']
  %s0 = inlined_call_operand.<no memory space> [shape: s32[1], index: 0, kind: input, shape index: {}]
  %s1 = inlined_call_operand.vmem [shape: f32[256,12], index: 1, kind: input, shape index: {}]
  %s2 = inlined_call_operand.vmem [shape: f32[256,4], index: 2, kind: input, shape index: {}]
  %s3 = inlined_call_operand.vmem [shape: f32[5,12,32], index: 3, kind: input, shape index: {}]
  %s4 = inlined_call_operand.vmem [shape: f32[5,4,32], index: 4, kind: input, shape index: {}]
  %s5 = inlined_call_operand.vmem [shape: f32[5,1,32], index: 5, kind: input, shape index: {}]
  %s6 = inlined_call_operand.vmem [shape: f32[5,32,32], index: 6, kind: input, shape index: {}]
  %s7 = inlined_call_operand.vmem [shape: f32[5,1,32], index: 7, kind: input, shape index: {}]
  %s8 = inlined_call_operand.vmem [shape: f32[5,32,12], index: 8, kind: input, shape index: {}]
  %s9 = inlined_call_operand.vmem [shape: f32[5,1,12], index: 9, kind: input, shape index: {}]
  %s10 = inlined_call_operand.vmem [shape: f32[256,12], index: 10, kind: output, shape index: {}]
  %s11 = sld [smem:[#allocation0]]
  $region69: #{tpu_custom_call.1} parent=0
    _
  %s13 = ssub.s32 1, %s11
  %s14 = scalar_select 0, %s13, %s11
  %15 = sst [smem:[#allocation3]] %s0
  loop: start=0, step=1, limit=4
  $region2: #{tpu_custom_call.1} parent=0 // loop_pre_header
    _
  $region3: #{tpu_custom_call.1} parent=0 // loop_header
    %s17 = sphi 0, %s21
    %p18 = scmp.ge.s32.totalorder %s17, 4
    %s27 = sphi 0, %s29
    %s30 = sphi 0, %s27
    %s31 = sphi 0, %s30
    %s47 = sphi 0, %s31
    %s53 = sphi 0, %s55
    %s56 = sphi 0, %s53
    %s57 = sphi 0, %s56
    %s73 = sphi 0, %s57
    %s81 = sphi 0, %s83
    %s84 = sphi 0, %s81
    %s85 = sphi 0, %s84
    %s101 = sphi 0, %s85
    %s109 = sphi 0, %s111
    %s112 = sphi 0, %s109
    %s113 = sphi 0, %s112
    %s129 = sphi 0, %s113
    %s137 = sphi 0, %s139
    %s140 = sphi 0, %s137
    %s141 = sphi 0, %s140
    %s157 = sphi 0, %s141
    %s165 = sphi 0, %s167
    %s168 = sphi 0, %s165
    %s169 = sphi 0, %s168
    %s185 = sphi 0, %s169
    %s193 = sphi 0, %s195
    %s196 = sphi 0, %s193
    %s197 = sphi 0, %s196
    %s213 = sphi 0, %s197
    %s221 = sphi 0, %s223
    %s224 = sphi 0, %s221
    %s225 = sphi 0, %s224
    %s241 = sphi 0, %s225
    %s249 = sphi 0, %s251
    %s252 = sphi 0, %s249
    %s253 = sphi 0, %s252
    %s269 = sphi 0, %s253
    %s275 = sphi 0, %s277
    %s278 = sphi 0, %s275
    %s279 = sphi 0, %s278
    %s295 = sphi 0, %s279
  $region4: #{tpu_custom_call.1} parent=0 // loop_header_branch
    %20 = sbr.rel (%p18) target = $region8
  $region5: #{tpu_custom_call.1} parent=0 // loop_body
    %s22 = ssub.s32 %s17, 1
    %s23 = ssub.s32 %s17, 2
    %s24 = sadd.s32 %s17, 1
    %s25 = ssub.s32 %s17, %s24
    %p26 = scmp.eq.s32.totalorder %s25, 0
    %s28 = sadd.s32 %s27, 1
    %s29 = scalar_select %p26, %s27, %s28
    %p32 = pneg %p26
    %p33 = scmp.eq.s32.totalorder %s17, 1
    %p34 = por %p32, %p33
    %p35 = scmp.ne.s32.totalorder %s27, %s30
    %p36 = scmp.eq.s32.totalorder %s17, 0
    %p37 = por %p35, %p36
    %p38 = scmp.ne.s32.totalorder %s27, %s30
    %p39 = scmp.eq.s32.totalorder %s22, 1
    %p40 = por %p38, %p39
    %p41 = scmp.ne.s32.totalorder %s30, %s31
    %p42 = scmp.eq.s32.totalorder %s22, 0
    %p43 = por %p41, %p42
    %p44 = scmp.ne.s32.totalorder %s30, %s31
    %p45 = scmp.eq.s32.totalorder %s23, 1
    %p46 = por %p44, %p45
    %p48 = scmp.ne.s32.totalorder %s31, %s47
    %p49 = scmp.eq.s32.totalorder %s23, 0
    %p50 = por %p48, %p49
    %s51 = ssub.s32 %s17, %s24
    %p52 = scmp.eq.s32.totalorder %s51, 0
    %s54 = sadd.s32 %s53, 1
    %s55 = scalar_select %p52, %s53, %s54
    %p58 = pneg %p52
    %p59 = scmp.eq.s32.totalorder %s17, 1
    %p60 = por %p58, %p59
    %p61 = scmp.ne.s32.totalorder %s53, %s56
    %p62 = scmp.eq.s32.totalorder %s17, 0
    %p63 = por %p61, %p62
    %p64 = scmp.ne.s32.totalorder %s53, %s56
    %p65 = scmp.eq.s32.totalorder %s22, 1
    %p66 = por %p64, %p65
    %p67 = scmp.ne.s32.totalorder %s56, %s57
    %p68 = scmp.eq.s32.totalorder %s22, 0
    %p69 = por %p67, %p68
    %p70 = scmp.ne.s32.totalorder %s56, %s57
    %p71 = scmp.eq.s32.totalorder %s23, 1
    %p72 = por %p70, %p71
    %p74 = scmp.ne.s32.totalorder %s57, %s73
    %p75 = scmp.eq.s32.totalorder %s23, 0
    %p76 = por %p74, %p75
    %s77 = sld [smem:[#allocation3]]
    %s78 = sld [smem:[#allocation3]]
    %s79 = ssub.s32 %s77, %s78
    %p80 = scmp.eq.s32.totalorder %s79, 0
    %s82 = sadd.s32 %s81, 1
    %s83 = scalar_select %p80, %s81, %s82
    %p86 = pneg %p80
    %p87 = scmp.eq.s32.totalorder %s17, 1
    %p88 = por %p86, %p87
    %p89 = scmp.ne.s32.totalorder %s81, %s84
    %p90 = scmp.eq.s32.totalorder %s17, 0
    %p91 = por %p89, %p90
    %p92 = scmp.ne.s32.totalorder %s81, %s84
    %p93 = scmp.eq.s32.totalorder %s22, 1
    %p94 = por %p92, %p93
    %p95 = scmp.ne.s32.totalorder %s84, %s85
    %p96 = scmp.eq.s32.totalorder %s22, 0
    %p97 = por %p95, %p96
    %p98 = scmp.ne.s32.totalorder %s84, %s85
    %p99 = scmp.eq.s32.totalorder %s23, 1
    %p100 = por %p98, %p99
    %p102 = scmp.ne.s32.totalorder %s85, %s101
    %p103 = scmp.eq.s32.totalorder %s23, 0
    %p104 = por %p102, %p103
    %s105 = sld [smem:[#allocation3]]
    %s106 = sld [smem:[#allocation3]]
    %s107 = ssub.s32 %s105, %s106
    %p108 = scmp.eq.s32.totalorder %s107, 0
    %s110 = sadd.s32 %s109, 1
    %s111 = scalar_select %p108, %s109, %s110
    %p114 = pneg %p108
    %p115 = scmp.eq.s32.totalorder %s17, 1
    %p116 = por %p114, %p115
    %p117 = scmp.ne.s32.totalorder %s109, %s112
    %p118 = scmp.eq.s32.totalorder %s17, 0
    %p119 = por %p117, %p118
    %p120 = scmp.ne.s32.totalorder %s109, %s112
    %p121 = scmp.eq.s32.totalorder %s22, 1
    %p122 = por %p120, %p121
    %p123 = scmp.ne.s32.totalorder %s112, %s113
    %p124 = scmp.eq.s32.totalorder %s22, 0
    %p125 = por %p123, %p124
    %p126 = scmp.ne.s32.totalorder %s112, %s113
    %p127 = scmp.eq.s32.totalorder %s23, 1
    %p128 = por %p126, %p127
    %p130 = scmp.ne.s32.totalorder %s113, %s129
    %p131 = scmp.eq.s32.totalorder %s23, 0
    %p132 = por %p130, %p131
    %s133 = sld [smem:[#allocation3]]
    %s134 = sld [smem:[#allocation3]]
    %s135 = ssub.s32 %s133, %s134
    %p136 = scmp.eq.s32.totalorder %s135, 0
    %s138 = sadd.s32 %s137, 1
    %s139 = scalar_select %p136, %s137, %s138
    %p142 = pneg %p136
    %p143 = scmp.eq.s32.totalorder %s17, 1
    %p144 = por %p142, %p143
    %p145 = scmp.ne.s32.totalorder %s137, %s140
    %p146 = scmp.eq.s32.totalorder %s17, 0
    %p147 = por %p145, %p146
    %p148 = scmp.ne.s32.totalorder %s137, %s140
    %p149 = scmp.eq.s32.totalorder %s22, 1
    %p150 = por %p148, %p149
    %p151 = scmp.ne.s32.totalorder %s140, %s141
    %p152 = scmp.eq.s32.totalorder %s22, 0
    %p153 = por %p151, %p152
    %p154 = scmp.ne.s32.totalorder %s140, %s141
    %p155 = scmp.eq.s32.totalorder %s23, 1
    %p156 = por %p154, %p155
    %p158 = scmp.ne.s32.totalorder %s141, %s157
    %p159 = scmp.eq.s32.totalorder %s23, 0
    %p160 = por %p158, %p159
    %s161 = sld [smem:[#allocation3]]
    %s162 = sld [smem:[#allocation3]]
    %s163 = ssub.s32 %s161, %s162
    %p164 = scmp.eq.s32.totalorder %s163, 0
    %s166 = sadd.s32 %s165, 1
    %s167 = scalar_select %p164, %s165, %s166
    %p170 = pneg %p164
    %p171 = scmp.eq.s32.totalorder %s17, 1
    %p172 = por %p170, %p171
    %p173 = scmp.ne.s32.totalorder %s165, %s168
    %p174 = scmp.eq.s32.totalorder %s17, 0
    %p175 = por %p173, %p174
    %p176 = scmp.ne.s32.totalorder %s165, %s168
    %p177 = scmp.eq.s32.totalorder %s22, 1
    %p178 = por %p176, %p177
    %p179 = scmp.ne.s32.totalorder %s168, %s169
    %p180 = scmp.eq.s32.totalorder %s22, 0
    %p181 = por %p179, %p180
    %p182 = scmp.ne.s32.totalorder %s168, %s169
    %p183 = scmp.eq.s32.totalorder %s23, 1
    %p184 = por %p182, %p183
    %p186 = scmp.ne.s32.totalorder %s169, %s185
    %p187 = scmp.eq.s32.totalorder %s23, 0
    %p188 = por %p186, %p187
    %s189 = sld [smem:[#allocation3]]
    %s190 = sld [smem:[#allocation3]]
    %s191 = ssub.s32 %s189, %s190
    %p192 = scmp.eq.s32.totalorder %s191, 0
    %s194 = sadd.s32 %s193, 1
    %s195 = scalar_select %p192, %s193, %s194
    %p198 = pneg %p192
    %p199 = scmp.eq.s32.totalorder %s17, 1
    %p200 = por %p198, %p199
    %p201 = scmp.ne.s32.totalorder %s193, %s196
    %p202 = scmp.eq.s32.totalorder %s17, 0
    %p203 = por %p201, %p202
    %p204 = scmp.ne.s32.totalorder %s193, %s196
    %p205 = scmp.eq.s32.totalorder %s22, 1
    %p206 = por %p204, %p205
    %p207 = scmp.ne.s32.totalorder %s196, %s197
    %p208 = scmp.eq.s32.totalorder %s22, 0
    %p209 = por %p207, %p208
    %p210 = scmp.ne.s32.totalorder %s196, %s197
    %p211 = scmp.eq.s32.totalorder %s23, 1
    %p212 = por %p210, %p211
    %p214 = scmp.ne.s32.totalorder %s197, %s213
    %p215 = scmp.eq.s32.totalorder %s23, 0
    %p216 = por %p214, %p215
    %s217 = sld [smem:[#allocation3]]
    %s218 = sld [smem:[#allocation3]]
    %s219 = ssub.s32 %s217, %s218
    %p220 = scmp.eq.s32.totalorder %s219, 0
    %s222 = sadd.s32 %s221, 1
    %s223 = scalar_select %p220, %s221, %s222
    %p226 = pneg %p220
    %p227 = scmp.eq.s32.totalorder %s17, 1
    %p228 = por %p226, %p227
    %p229 = scmp.ne.s32.totalorder %s221, %s224
    %p230 = scmp.eq.s32.totalorder %s17, 0
    %p231 = por %p229, %p230
    %p232 = scmp.ne.s32.totalorder %s221, %s224
    %p233 = scmp.eq.s32.totalorder %s22, 1
    %p234 = por %p232, %p233
    %p235 = scmp.ne.s32.totalorder %s224, %s225
    %p236 = scmp.eq.s32.totalorder %s22, 0
    %p237 = por %p235, %p236
    %p238 = scmp.ne.s32.totalorder %s224, %s225
    %p239 = scmp.eq.s32.totalorder %s23, 1
    %p240 = por %p238, %p239
    %p242 = scmp.ne.s32.totalorder %s225, %s241
    %p243 = scmp.eq.s32.totalorder %s23, 0
    %p244 = por %p242, %p243
    %s245 = sld [smem:[#allocation3]]
    %s246 = sld [smem:[#allocation3]]
    %s247 = ssub.s32 %s245, %s246
    %p248 = scmp.eq.s32.totalorder %s247, 0
    %s250 = sadd.s32 %s249, 1
    %s251 = scalar_select %p248, %s249, %s250
    %p254 = pneg %p248
    %p255 = scmp.eq.s32.totalorder %s17, 1
    %p256 = por %p254, %p255
    %p257 = scmp.ne.s32.totalorder %s249, %s252
    %p258 = scmp.eq.s32.totalorder %s17, 0
    %p259 = por %p257, %p258
    %p260 = scmp.ne.s32.totalorder %s249, %s252
    %p261 = scmp.eq.s32.totalorder %s22, 1
    %p262 = por %p260, %p261
    %p263 = scmp.ne.s32.totalorder %s252, %s253
    %p264 = scmp.eq.s32.totalorder %s22, 0
    %p265 = por %p263, %p264
    %p266 = scmp.ne.s32.totalorder %s252, %s253
    %p267 = scmp.eq.s32.totalorder %s23, 1
    %p268 = por %p266, %p267
    %p270 = scmp.ne.s32.totalorder %s253, %s269
    %p271 = scmp.eq.s32.totalorder %s23, 0
    %p272 = por %p270, %p271
    %s273 = ssub.s32 %s17, %s24
    %p274 = scmp.eq.s32.totalorder %s273, 0
    %s276 = sadd.s32 %s275, 1
    %s277 = scalar_select %p274, %s275, %s276
    %p280 = pneg %p274
    %p281 = scmp.eq.s32.totalorder %s17, 1
    %p282 = por %p280, %p281
    %p283 = scmp.ne.s32.totalorder %s275, %s278
    %p284 = scmp.eq.s32.totalorder %s17, 0
    %p285 = por %p283, %p284
    %p286 = scmp.ne.s32.totalorder %s275, %s278
    %p287 = scmp.eq.s32.totalorder %s22, 1
    %p288 = por %p286, %p287
    %p289 = scmp.ne.s32.totalorder %s278, %s279
    %p290 = scmp.eq.s32.totalorder %s22, 0
    %p291 = por %p289, %p290
    %p292 = scmp.ne.s32.totalorder %s278, %s279
    %p293 = scmp.eq.s32.totalorder %s23, 1
    %p294 = por %p292, %p293
    %p296 = scmp.ne.s32.totalorder %s279, %s295
    %p297 = scmp.eq.s32.totalorder %s23, 0
    %p298 = por %p296, %p297
    %p299 = scmp.le.s32.totalorder 1, %s17
    %p300 = scmp.lt.s32.totalorder %s17, 3
    %p301 = pnand %p299, %p300
    %p302 = pneg %p301
    // Predicated region
    $region9: #{tpu_custom_call.1} parent=5 // pred_check
      _
    $region10: #{tpu_custom_call.1} parent=5 // pred_check_branch
      %304 = sbr.rel (%p301) target = $region12
    $region11: #{tpu_custom_call.1} parent=5 // pred_region
      %s305 = ssub.s32 %s17, 1
      // Predicated region
      $region13: #{tpu_custom_call.1} parent=11 // pred_check
        %p306 = pneg %p97
      $region14: #{tpu_custom_call.1} parent=11 // pred_check_branch
        %308 = sbr.rel (%p306) target = $region16
      $region15: #{tpu_custom_call.1} parent=11 // pred_region
        %s309 = sld [smem:[#allocation3]]
        %p310 = scmp.lt.s32.totalorder %s309, 4
        %s311 = scalar_select %p310, %s309, 4
        %s312 = smul.addr %s311, 2
        %s313 = smul.addr %s312, 8
        %s314 = scalar_lea.vmem %s3, %s313
        %s315 = sld [smem:[#allocation3]]
      $region16: #{tpu_custom_call.1} parent=11 // pred_fallthru
        _
      // Predicated region
      $region17: #{tpu_custom_call.1} parent=11 // pred_check
        %p316 = pneg %p125
      $region18: #{tpu_custom_call.1} parent=11 // pred_check_branch
        %318 = sbr.rel (%p316) target = $region20
      $region19: #{tpu_custom_call.1} parent=11 // pred_region
        %s319 = sld [smem:[#allocation3]]
        %p320 = scmp.lt.s32.totalorder %s319, 4
        %s321 = scalar_select %p320, %s319, 4
        %s322 = smul.addr %s321, 4
        %s323 = scalar_lea.vmem %s4, %s322
        %s324 = sld [smem:[#allocation3]]
      $region20: #{tpu_custom_call.1} parent=11 // pred_fallthru
        _
      // Predicated region
      $region21: #{tpu_custom_call.1} parent=11 // pred_check
        %p325 = pneg %p153
      $region22: #{tpu_custom_call.1} parent=11 // pred_check_branch
        %327 = sbr.rel (%p325) target = $region24
      $region23: #{tpu_custom_call.1} parent=11 // pred_region
        %s328 = sld [smem:[#allocation3]]
        %p329 = scmp.lt.s32.totalorder %s328, 4
        %s330 = scalar_select %p329, %s328, 4
        %s331 = scalar_lea.vmem %s5, %s330
        %s332 = sld [smem:[#allocation3]]
      $region24: #{tpu_custom_call.1} parent=11 // pred_fallthru
        _
      // Predicated region
      $region25: #{tpu_custom_call.1} parent=11 // pred_check
        %p333 = pneg %p181
      $region26: #{tpu_custom_call.1} parent=11 // pred_check_branch
        %335 = sbr.rel (%p333) target = $region28
      $region27: #{tpu_custom_call.1} parent=11 // pred_region
        %s336 = sld [smem:[#allocation3]]
        %p337 = scmp.lt.s32.totalorder %s336, 4
        %s338 = scalar_select %p337, %s336, 4
        %s339 = smul.addr %s338, 4
        %s340 = smul.addr %s339, 8
        %s341 = scalar_lea.vmem %s6, %s340
        %s342 = sld [smem:[#allocation3]]
      $region28: #{tpu_custom_call.1} parent=11 // pred_fallthru
        _
      // Predicated region
      $region29: #{tpu_custom_call.1} parent=11 // pred_check
        %p343 = pneg %p209
      $region30: #{tpu_custom_call.1} parent=11 // pred_check_branch
        %345 = sbr.rel (%p343) target = $region32
      $region31: #{tpu_custom_call.1} parent=11 // pred_region
        %s346 = sld [smem:[#allocation3]]
        %p347 = scmp.lt.s32.totalorder %s346, 4
        %s348 = scalar_select %p347, %s346, 4
        %s349 = scalar_lea.vmem %s7, %s348
        %s350 = sld [smem:[#allocation3]]
      $region32: #{tpu_custom_call.1} parent=11 // pred_fallthru
        _
      // Predicated region
      $region33: #{tpu_custom_call.1} parent=11 // pred_check
        %p351 = pneg %p237
      $region34: #{tpu_custom_call.1} parent=11 // pred_check_branch
        %353 = sbr.rel (%p351) target = $region36
      $region35: #{tpu_custom_call.1} parent=11 // pred_region
        %s354 = sld [smem:[#allocation3]]
        %p355 = scmp.lt.s32.totalorder %s354, 4
        %s356 = scalar_select %p355, %s354, 4
        %s357 = smul.addr %s356, 4
        %s358 = smul.addr %s357, 8
        %s359 = scalar_lea.vmem %s8, %s358
        %s360 = sld [smem:[#allocation3]]
      $region36: #{tpu_custom_call.1} parent=11 // pred_fallthru
        _
      // Predicated region
      $region37: #{tpu_custom_call.1} parent=11 // pred_check
        %p361 = pneg %p265
      $region38: #{tpu_custom_call.1} parent=11 // pred_check_branch
        %363 = sbr.rel (%p361) target = $region40
      $region39: #{tpu_custom_call.1} parent=11 // pred_region
        %s364 = sld [smem:[#allocation3]]
        %p365 = scmp.lt.s32.totalorder %s364, 4
        %s366 = scalar_select %p365, %s364, 4
        %s367 = scalar_lea.vmem %s9, %s366
        %s368 = sld [smem:[#allocation3]]
      $region40: #{tpu_custom_call.1} parent=11 // pred_fallthru
        _
    $region12: #{tpu_custom_call.1} parent=5 // pred_fallthru
      _
    %p369 = scmp.lt.s32.totalorder %s17, 2
    // Predicated region
    $region41: #{tpu_custom_call.1} parent=5 // pred_check
      %p370 = pneg %p369
    $region42: #{tpu_custom_call.1} parent=5 // pred_check_branch
      %372 = sbr.rel (%p370) target = $region44
    $region43: #{tpu_custom_call.1} parent=5 // pred_region
      // Predicated region
      $region45: #{tpu_custom_call.1} parent=43 // pred_check
        %p373 = pneg %p37
      $region46: #{tpu_custom_call.1} parent=43 // pred_check_branch
        %375 = sbr.rel (%p373) target = $region48
      $region47: #{tpu_custom_call.1} parent=43 // pred_region
        %s376 = smul.u32 16, %s17
        %p377 = scmp.lt.s32.totalorder %s376, 31
        %s378 = scalar_select %p377, %s376, 31
        %s379 = smul.addr %s378, 8
        %s380 = scalar_lea.vmem %s1, %s379
        %s381 = smul.u32 16, %s17
      $region48: #{tpu_custom_call.1} parent=43 // pred_fallthru
        _
      // Predicated region
      $region49: #{tpu_custom_call.1} parent=43 // pred_check
        %p382 = pneg %p63
      $region50: #{tpu_custom_call.1} parent=43 // pred_check_branch
        %384 = sbr.rel (%p382) target = $region52
      $region51: #{tpu_custom_call.1} parent=43 // pred_region
        %s385 = smul.u32 16, %s17
        %p386 = scmp.lt.s32.totalorder %s385, 31
        %s387 = scalar_select %p386, %s385, 31
        %s388 = smul.addr %s387, 8
        %s389 = scalar_lea.vmem %s2, %s388
        %s390 = smul.u32 16, %s17
      $region52: #{tpu_custom_call.1} parent=43 // pred_fallthru
        _
    $region44: #{tpu_custom_call.1} parent=5 // pred_fallthru
      _
    %p391 = scmp.le.s32.totalorder 1, %s17
    %p392 = scmp.lt.s32.totalorder %s17, 3
    %p393 = pnand %p391, %p392
    %p394 = pneg %p393
    // Predicated region
    $region53: #{tpu_custom_call.1} parent=5 // pred_check
      _
    $region54: #{tpu_custom_call.1} parent=5 // pred_check_branch
      %396 = sbr.rel (%p393) target = $region56
    $region55: #{tpu_custom_call.1} parent=5 // pred_region
      %s397 = ssub.s32 %s17, 1
      %s398 = smul.u32 16, %s22
      %p399 = scmp.lt.s32.totalorder %s398, 31
      %s400 = scalar_select %p399, %s398, 31
      %s401 = smul.addr %s400, 8
      %s402 = scalar_lea.vmem %s1, %s401
      %p403 = pneg %p43
      %p404 = pneg %p40
      %s405 = smul.u32 16, %s22
      %p406 = scmp.lt.s32.totalorder %s405, 31
      %s407 = scalar_select %p406, %s405, 31
      %s408 = smul.addr %s407, 8
      %s409 = scalar_lea.vmem %s2, %s408
      %p410 = pneg %p69
      %p411 = pneg %p66
      %s412 = sld [smem:[#allocation3]]
      %p413 = scmp.lt.s32.totalorder %s412, 4
      %s414 = scalar_select %p413, %s412, 4
      %s415 = smul.addr %s414, 2
      %s416 = smul.addr %s415, 8
      %s417 = scalar_lea.vmem %s3, %s416
      %p418 = pneg %p97
      %p419 = pneg %p94
      %s420 = sld [smem:[#allocation3]]
      %p421 = scmp.lt.s32.totalorder %s420, 4
      %s422 = scalar_select %p421, %s420, 4
      %s423 = smul.addr %s422, 4
      %s424 = scalar_lea.vmem %s4, %s423
      %p425 = pneg %p125
      %p426 = pneg %p122
      %s427 = sld [smem:[#allocation3]]
      %p428 = scmp.lt.s32.totalorder %s427, 4
      %s429 = scalar_select %p428, %s427, 4
      %s430 = scalar_lea.vmem %s5, %s429
      %p431 = pneg %p153
      %p432 = pneg %p150
      %s433 = sld [smem:[#allocation3]]
      %p434 = scmp.lt.s32.totalorder %s433, 4
      %s435 = scalar_select %p434, %s433, 4
      %s436 = smul.addr %s435, 4
      %s437 = smul.addr %s436, 8
      %s438 = scalar_lea.vmem %s6, %s437
      %p439 = pneg %p181
      %p440 = pneg %p178
      %s441 = sld [smem:[#allocation3]]
      %p442 = scmp.lt.s32.totalorder %s441, 4
      %s443 = scalar_select %p442, %s441, 4
      %s444 = scalar_lea.vmem %s7, %s443
      %p445 = pneg %p209
      %p446 = pneg %p206
      %s447 = sld [smem:[#allocation3]]
      %p448 = scmp.lt.s32.totalorder %s447, 4
      %s449 = scalar_select %p448, %s447, 4
      %s450 = smul.addr %s449, 4
      %s451 = smul.addr %s450, 8
      %s452 = scalar_lea.vmem %s8, %s451
      %p453 = pneg %p237
      %p454 = pneg %p234
      %s455 = sld [smem:[#allocation3]]
      %p456 = scmp.lt.s32.totalorder %s455, 4
      %s457 = scalar_select %p456, %s455, 4
      %s458 = scalar_lea.vmem %s9, %s457
      %p459 = pneg %p265
      %p460 = pneg %p262
      %p461 = pneg %p291
      %p462 = pneg %p288
      %s463 = smul.u32 16, %s22
      %p464 = scmp.lt.s32.totalorder %s463, 31
      %s465 = scalar_select %p464, %s463, 31
      %s466 = smul.addr %s465, 8
      %s467 = scalar_lea.vmem %s10, %s466
      %s468 = smul.u32 16, %s22
      %p469 = scmp.lt.s32.totalorder %s468, 31
      %s470 = scalar_select %p469, %s468, 31
      %s471 = smul.addr %s470, 8
      %s472 = scalar_lea.vmem %s1, %s471
      %s473 = smul.u32 16, %s22
      %s474 = smul.u32 16, %s22
      %p475 = scmp.lt.s32.totalorder %s474, 31
      %s476 = scalar_select %p475, %s474, 31
      %s477 = smul.addr %s476, 8
      %s478 = scalar_lea.vmem %s2, %s477
      %s479 = smul.u32 16, %s22
      %s480 = sld [smem:[#allocation3]]
      %p481 = scmp.lt.s32.totalorder %s480, 4
      %s482 = scalar_select %p481, %s480, 4
      %s483 = smul.addr %s482, 2
      %s484 = smul.addr %s483, 8
      %s485 = scalar_lea.vmem %s3, %s484
      %s486 = sld [smem:[#allocation3]]
      %s487 = sld [smem:[#allocation3]]
      %p488 = scmp.lt.s32.totalorder %s487, 4
      %s489 = scalar_select %p488, %s487, 4
      %s490 = smul.addr %s489, 4
      %s491 = scalar_lea.vmem %s4, %s490
      %s492 = sld [smem:[#allocation3]]
      %s493 = sld [smem:[#allocation3]]
      %p494 = scmp.lt.s32.totalorder %s493, 4
      %s495 = scalar_select %p494, %s493, 4
      %s496 = scalar_lea.vmem %s5, %s495
      %s497 = sld [smem:[#allocation3]]
      %s498 = sld [smem:[#allocation3]]
      %p499 = scmp.lt.s32.totalorder %s498, 4
      %s500 = scalar_select %p499, %s498, 4
      %s501 = smul.addr %s500, 4
      %s502 = smul.addr %s501, 8
      %s503 = scalar_lea.vmem %s6, %s502
      %s504 = sld [smem:[#allocation3]]
      %s505 = sld [smem:[#allocation3]]
      %p506 = scmp.lt.s32.totalorder %s505, 4
      %s507 = scalar_select %p506, %s505, 4
      %s508 = scalar_lea.vmem %s7, %s507
      %s509 = sld [smem:[#allocation3]]
      %s510 = sld [smem:[#allocation3]]
      %p511 = scmp.lt.s32.totalorder %s510, 4
      %s512 = scalar_select %p511, %s510, 4
      %s513 = smul.addr %s512, 4
      %s514 = smul.addr %s513, 8
      %s515 = scalar_lea.vmem %s8, %s514
      %s516 = sld [smem:[#allocation3]]
      %s517 = sld [smem:[#allocation3]]
      %p518 = scmp.lt.s32.totalorder %s517, 4
      %s519 = scalar_select %p518, %s517, 4
      %s520 = scalar_lea.vmem %s9, %s519
      %s521 = sld [smem:[#allocation3]]
      %s522 = smul.u32 16, %s22
      %p523 = scmp.lt.s32.totalorder %s522, 31
      %s524 = scalar_select %p523, %s522, 31
      %s525 = smul.addr %s524, 8
      %s526 = scalar_lea.vmem %s10, %s525
      %s527 = smul.u32 16, %s22
      %v528 = vld [vmem:[%s472] sm:$0xff]
      %v529 = vld [vmem:[%s472 + $0x8] sm:$0xff]
      %v530 = vld [vmem:[%s472 + $0x10] sm:$0xff]
      %v531 = vld [vmem:[%s472 + $0x18] sm:$0xff]
      %v532 = vld [vmem:[%s472 + $0x20] sm:$0xff]
      %v533 = vld [vmem:[%s472 + $0x28] sm:$0xff]
      %v534 = vld [vmem:[%s472 + $0x30] sm:$0xff]
      %v535 = vld [vmem:[%s472 + $0x38] sm:$0xff]
      %v536 = vld [vmem:[%s472 + $0x40] sm:$0xff]
      %v537 = vld [vmem:[%s472 + $0x48] sm:$0xff]
      %v538 = vld [vmem:[%s472 + $0x50] sm:$0xff]
      %v539 = vld [vmem:[%s472 + $0x58] sm:$0xff]
      %v540 = vld [vmem:[%s472 + $0x60] sm:$0xff]
      %v541 = vld [vmem:[%s472 + $0x68] sm:$0xff]
      %v542 = vld [vmem:[%s472 + $0x70] sm:$0xff]
      %v543 = vld [vmem:[%s472 + $0x78] sm:$0xff]
      %v544 = vld [vmem:[%s478] sm:$0xff]
      %v545 = vld [vmem:[%s478 + $0x8] sm:$0xff]
      %v546 = vld [vmem:[%s478 + $0x10] sm:$0xff]
      %v547 = vld [vmem:[%s478 + $0x18] sm:$0xff]
      %v548 = vld [vmem:[%s478 + $0x20] sm:$0xff]
      %v549 = vld [vmem:[%s478 + $0x28] sm:$0xff]
      %v550 = vld [vmem:[%s478 + $0x30] sm:$0xff]
      %v551 = vld [vmem:[%s478 + $0x38] sm:$0xff]
      %v552 = vld [vmem:[%s478 + $0x40] sm:$0xff]
      %v553 = vld [vmem:[%s478 + $0x48] sm:$0xff]
      %v554 = vld [vmem:[%s478 + $0x50] sm:$0xff]
      %v555 = vld [vmem:[%s478 + $0x58] sm:$0xff]
      %v556 = vld [vmem:[%s478 + $0x60] sm:$0xff]
      %v557 = vld [vmem:[%s478 + $0x68] sm:$0xff]
      %v558 = vld [vmem:[%s478 + $0x70] sm:$0xff]
      %v559 = vld [vmem:[%s478 + $0x78] sm:$0xff]
      %v560 = vld [vmem:[%s485] sm:$0xff]
      %v561 = vld [vmem:[%s485 + $0x8] sm:$0xf]
      %v562 = vld [vmem:[%s491] sm:$0xf]
      %vm563 = vcmask 31744
      %v565 = vsel %vm563, %v544, 0
      %v568 = vsel %vm563, %v545, 0
      %v571 = vsel %vm563, %v546, 0
      %v574 = vsel %vm563, %v547, 0
      %v577 = vsel %vm563, %v548, 0
      %v580 = vsel %vm563, %v549, 0
      %v583 = vsel %vm563, %v550, 0
      %v586 = vsel %vm563, %v551, 0
      %v589 = vsel %vm563, %v552, 0
      %v592 = vsel %vm563, %v553, 0
      %v595 = vsel %vm563, %v554, 0
      %v598 = vsel %vm563, %v555, 0
      %v601 = vsel %vm563, %v556, 0
      %v604 = vsel %vm563, %v557, 0
      %v607 = vsel %vm563, %v558, 0
      %v610 = vsel %vm563, %v559, 0
      %vm612 = vcmask 1043456
      %v614 = vsel %vm612, %v562, 0
      %616 = vmatprep.subr.mxu0 0.0
      %617 = vmatpush1.msra.mxu0 %v614
      %618 = vmatprep.subr.mxu0 0.0
      %619 = vmatpush1.msra.mxu0 0.0
      %620 = vmatprep.subr.mxu0 0.0
      %621 = vmatpush1.msra.mxu0 0.0
      %622 = vmatprep.subr.mxu0 0.0
      %623 = vmatpush1.msra.mxu0 0.0
      %624 = vmatprep.subr.mxu0 0.0
      %625 = vmatpush1.msra.mxu0 0.0
      %626 = vmatprep.subr.mxu0 0.0
      %627 = vmatpush1.msra.mxu0 0.0
      %628 = vmatprep.subr.mxu0 0.0
      %629 = vmatpush1.msra.mxu0 0.0
      %630 = vmatprep.subr.mxu0 0.0
      %631 = vmatpush1.msra.mxu0 0.0
      %632 = vmatprep.subr.mxu0 0.0
      %633 = vmatpush1.msra.mxu0 0.0
      %634 = vmatprep.subr.mxu0 0.0
      %635 = vmatpush1.msra.mxu0 0.0
      %636 = vmatprep.subr.mxu0 0.0
      %637 = vmatpush1.msra.mxu0 0.0
      %638 = vmatprep.subr.mxu0 0.0
      %639 = vmatpush1.msra.mxu0 0.0
      %640 = vmatprep.subr.mxu0 0.0
      %641 = vmatpush1.msra.mxu0 0.0
      %642 = vmatprep.subr.mxu0 0.0
      %643 = vmatpush1.msra.mxu0 0.0
      %644 = vmatprep.subr.mxu0 0.0
      %645 = vmatpush1.msra.mxu0 0.0
      %646 = vmatprep.subr.mxu0 0.0
      %647 = vmatpush1.msra.mxu0 0.0
      %648 = vmatprep.subr.mxu0 0.0
      %649 = vmatpush1.msra.mxu0 0.0
      %650 = vmatprep.subr.mxu0 0.0
      %651 = vmatpush1.msra.mxu0 0.0
      %652 = vmatprep.subr.mxu0 0.0
      %653 = vmatpush1.msra.mxu0 0.0
      %654 = vmatprep.subr.mxu0 0.0
      %655 = vmatpush1.msra.mxu0 0.0
      %656 = vmatprep.subr.mxu0 0.0
      %657 = vmatpush1.msra.mxu0 0.0
      %658 = vmatprep.subr.mxu0 0.0
      %659 = vmatpush1.msra.mxu0 0.0
      %660 = vmatprep.subr.mxu0 0.0
      %661 = vmatpush1.msra.mxu0 0.0
      %662 = vmatprep.subr.mxu0 0.0
      %663 = vmatpush1.msra.mxu0 0.0
      %664 = vmatprep.subr.mxu0 0.0
      %665 = vmatpush1.msra.mxu0 0.0
      %666 = vmatprep.subr.mxu0 0.0
      %667 = vmatpush1.msra.mxu0 0.0
      %668 = vmatprep.subr.mxu0 0.0
      %669 = vmatpush1.msra.mxu0 0.0
      %670 = vmatprep.subr.mxu0 0.0
      %671 = vmatpush1.msra.mxu0 0.0
      %672 = vmatprep.subr.mxu0 0.0
      %673 = vmatpush1.msra.mxu0 0.0
      %674 = vmatprep.subr.mxu0 0.0
      %675 = vmatpush1.msra.mxu0 0.0
      %676 = vmatprep.subr.mxu0 0.0
      %677 = vmatpush1.msra.mxu0 0.0
      %678 = vmatprep.subr.mxu0 0.0
      %679 = vmatpush1.msra.mxu0 0.0
      %680 = vmatprep.mubr.f32.mxu0 0.0
      %681 = vmatmul.mubr.f32.gmra.mrb[0].mxu0 %v565
      %v682 = vpop.f32.mrb[0].mxu0
      %v683 = vadd.f32 0.0, %v682
      %v684 = vpop.f32.mrb[0].mxu0
      %685 = vmatprep.mubr.f32.mxu0 0.0
      %686 = vmatmul.mubr.f32.gmra.mrb[0].mxu0 %v568
      %v687 = vpop.f32.mrb[0].mxu0
      %v688 = vadd.f32 0.0, %v687
      %v689 = vpop.f32.mrb[0].mxu0
      %690 = vmatprep.mubr.f32.mxu0 0.0
      %691 = vmatmul.mubr.f32.gmra.mrb[0].mxu0 %v571
      %v692 = vpop.f32.mrb[0].mxu0
      %v693 = vadd.f32 0.0, %v692
      %v694 = vpop.f32.mrb[0].mxu0
      %695 = vmatprep.mubr.f32.mxu0 0.0
      %696 = vmatmul.mubr.f32.gmra.mrb[0].mxu0 %v574
      %v697 = vpop.f32.mrb[0].mxu0
      %v698 = vadd.f32 0.0, %v697
      %v699 = vpop.f32.mrb[0].mxu0
      %700 = vmatprep.mubr.f32.mxu0 0.0
      %701 = vmatmul.mubr.f32.gmra.mrb[0].mxu0 %v577
      %v702 = vpop.f32.mrb[0].mxu0
      %v703 = vadd.f32 0.0, %v702
      %v704 = vpop.f32.mrb[0].mxu0
      %705 = vmatprep.mubr.f32.mxu0 0.0
      %706 = vmatmul.mubr.f32.gmra.mrb[0].mxu0 %v580
      %v707 = vpop.f32.mrb[0].mxu0
      %v708 = vadd.f32 0.0, %v707
      %v709 = vpop.f32.mrb[0].mxu0
      %710 = vmatprep.mubr.f32.mxu0 0.0
      %711 = vmatmul.mubr.f32.gmra.mrb[0].mxu0 %v583
      %v712 = vpop.f32.mrb[0].mxu0
      %v713 = vadd.f32 0.0, %v712
      %v714 = vpop.f32.mrb[0].mxu0
      %715 = vmatprep.mubr.f32.mxu0 0.0
      %716 = vmatmul.mubr.f32.gmra.mrb[0].mxu0 %v586
      %v717 = vpop.f32.mrb[0].mxu0
      %v718 = vadd.f32 0.0, %v717
      %v719 = vpop.f32.mrb[0].mxu0
      %720 = vmatprep.mubr.f32.mxu0 0.0
      %721 = vmatmul.mubr.f32.gmra.mrb[0].mxu0 %v589
      %v722 = vpop.f32.mrb[0].mxu0
      %v723 = vadd.f32 0.0, %v722
      %v724 = vpop.f32.mrb[0].mxu0
      %725 = vmatprep.mubr.f32.mxu0 0.0
      %726 = vmatmul.mubr.f32.gmra.mrb[0].mxu0 %v592
      %v727 = vpop.f32.mrb[0].mxu0
      %v728 = vadd.f32 0.0, %v727
      %v729 = vpop.f32.mrb[0].mxu0
      %730 = vmatprep.mubr.f32.mxu0 0.0
      %731 = vmatmul.mubr.f32.gmra.mrb[0].mxu0 %v595
      %v732 = vpop.f32.mrb[0].mxu0
      %v733 = vadd.f32 0.0, %v732
      %v734 = vpop.f32.mrb[0].mxu0
      %735 = vmatprep.mubr.f32.mxu0 0.0
      %736 = vmatmul.mubr.f32.gmra.mrb[0].mxu0 %v598
      %v737 = vpop.f32.mrb[0].mxu0
      %v738 = vadd.f32 0.0, %v737
      %v739 = vpop.f32.mrb[0].mxu0
      %740 = vmatprep.mubr.f32.mxu0 0.0
      %741 = vmatmul.mubr.f32.gmra.mrb[0].mxu0 %v601
      %v742 = vpop.f32.mrb[0].mxu0
      %v743 = vadd.f32 0.0, %v742
      %v744 = vpop.f32.mrb[0].mxu0
      %745 = vmatprep.mubr.f32.mxu0 0.0
      %746 = vmatmul.mubr.f32.gmra.mrb[0].mxu0 %v604
      %v747 = vpop.f32.mrb[0].mxu0
      %v748 = vadd.f32 0.0, %v747
      %v749 = vpop.f32.mrb[0].mxu0
      %750 = vmatprep.mubr.f32.mxu0 0.0
      %751 = vmatmul.mubr.f32.gmra.mrb[0].mxu0 %v607
      %v752 = vpop.f32.mrb[0].mxu0
      %v753 = vadd.f32 0.0, %v752
      %v754 = vpop.f32.mrb[0].mxu0
      %755 = vmatprep.mubr.f32.mxu0 0.0
      %756 = vmatmul.mubr.f32.gmra.mrb[0].mxu0 %v610
      %v757 = vpop.f32.mrb[0].mxu0
      %v758 = vadd.f32 0.0, %v757
      %v759 = vpop.f32.mrb[0].mxu0
      %760 = vdwg.mxu0
      %vm761 = vcmask 97280
      %v763 = vsel %vm761, %v528, 0
      %v766 = vsel %vm761, %v529, 0
      %v769 = vsel %vm761, %v530, 0
      %v772 = vsel %vm761, %v531, 0
      %v775 = vsel %vm761, %v532, 0
      %v778 = vsel %vm761, %v533, 0
      %v781 = vsel %vm761, %v534, 0
      %v784 = vsel %vm761, %v535, 0
      %v787 = vsel %vm761, %v536, 0
      %v790 = vsel %vm761, %v537, 0
      %v793 = vsel %vm761, %v538, 0
      %v796 = vsel %vm761, %v539, 0
      %v799 = vsel %vm761, %v540, 0
      %v802 = vsel %vm761, %v541, 0
      %v805 = vsel %vm761, %v542, 0
      %v808 = vsel %vm761, %v543, 0
      %v811 = vsel %vm612, %v561, 0
      %813 = vmatprep.subr.mxu0 0.0
      %814 = vmatpush1.msra.mxu0 %v560
      %815 = vmatprep.subr.mxu0 0.0
      %816 = vmatpush1.msra.mxu0 %v811
      %817 = vmatprep.subr.mxu0 0.0
      %818 = vmatpush1.msra.mxu0 0.0
      %819 = vmatprep.subr.mxu0 0.0
      %820 = vmatpush1.msra.mxu0 0.0
      %821 = vmatprep.subr.mxu0 0.0
      %822 = vmatpush1.msra.mxu0 0.0
      %823 = vmatprep.subr.mxu0 0.0
      %824 = vmatpush1.msra.mxu0 0.0
      %825 = vmatprep.subr.mxu0 0.0
      %826 = vmatpush1.msra.mxu0 0.0
      %827 = vmatprep.subr.mxu0 0.0
      %828 = vmatpush1.msra.mxu0 0.0
      %829 = vmatprep.subr.mxu0 0.0
      %830 = vmatpush1.msra.mxu0 0.0
      %831 = vmatprep.subr.mxu0 0.0
      %832 = vmatpush1.msra.mxu0 0.0
      %833 = vmatprep.subr.mxu0 0.0
      %834 = vmatpush1.msra.mxu0 0.0
      %835 = vmatprep.subr.mxu0 0.0
      %836 = vmatpush1.msra.mxu0 0.0
      %837 = vmatprep.subr.mxu0 0.0
      %838 = vmatpush1.msra.mxu0 0.0
      %839 = vmatprep.subr.mxu0 0.0
      %840 = vmatpush1.msra.mxu0 0.0
      %841 = vmatprep.subr.mxu0 0.0
      %842 = vmatpush1.msra.mxu0 0.0
      %843 = vmatprep.subr.mxu0 0.0
      %844 = vmatpush1.msra.mxu0 0.0
      %845 = vmatprep.subr.mxu0 0.0
      %846 = vmatpush1.msra.mxu0 0.0
      %847 = vmatprep.subr.mxu0 0.0
      %848 = vmatpush1.msra.mxu0 0.0
      %849 = vmatprep.subr.mxu0 0.0
      %850 = vmatpush1.msra.mxu0 0.0
      %851 = vmatprep.subr.mxu0 0.0
      %852 = vmatpush1.msra.mxu0 0.0
      %853 = vmatprep.subr.mxu0 0.0
      %854 = vmatpush1.msra.mxu0 0.0
      %855 = vmatprep.subr.mxu0 0.0
      %856 = vmatpush1.msra.mxu0 0.0
      %857 = vmatprep.subr.mxu0 0.0
      %858 = vmatpush1.msra.mxu0 0.0
      %859 = vmatprep.subr.mxu0 0.0
      %860 = vmatpush1.msra.mxu0 0.0
      %861 = vmatprep.subr.mxu0 0.0
      %862 = vmatpush1.msra.mxu0 0.0
      %863 = vmatprep.subr.mxu0 0.0
      %864 = vmatpush1.msra.mxu0 0.0
      %865 = vmatprep.subr.mxu0 0.0
      %866 = vmatpush1.msra.mxu0 0.0
      %867 = vmatprep.subr.mxu0 0.0
      %868 = vmatpush1.msra.mxu0 0.0
      %869 = vmatprep.subr.mxu0 0.0
      %870 = vmatpush1.msra.mxu0 0.0
      %871 = vmatprep.subr.mxu0 0.0
      %872 = vmatpush1.msra.mxu0 0.0
      %873 = vmatprep.subr.mxu0 0.0
      %874 = vmatpush1.msra.mxu0 0.0
      %875 = vmatprep.subr.mxu0 0.0
      %876 = vmatpush1.msra.mxu0 0.0
      %877 = vmatprep.mubr.f32.mxu0 0.0
      %878 = vmatmul.mubr.f32.gmra.mrb[0].mxu0 %v763
      %v879 = vpop.f32.mrb[0].mxu0
      %v880 = vadd.f32 %v683, %v879
      %v881 = vpop.f32.mrb[0].mxu0
      %882 = vmatprep.mubr.f32.mxu0 0.0
      %883 = vmatmul.mubr.f32.gmra.mrb[0].mxu0 %v766
      %v884 = vpop.f32.mrb[0].mxu0
      %v885 = vadd.f32 %v688, %v884
      %v886 = vpop.f32.mrb[0].mxu0
      %887 = vmatprep.mubr.f32.mxu0 0.0
      %888 = vmatmul.mubr.f32.gmra.mrb[0].mxu0 %v769
      %v889 = vpop.f32.mrb[0].mxu0
      %v890 = vadd.f32 %v693, %v889
      %v891 = vpop.f32.mrb[0].mxu0
      %892 = vmatprep.mubr.f32.mxu0 0.0
      %893 = vmatmul.mubr.f32.gmra.mrb[0].mxu0 %v772
      %v894 = vpop.f32.mrb[0].mxu0
      %v895 = vadd.f32 %v698, %v894
      %v896 = vpop.f32.mrb[0].mxu0
      %897 = vmatprep.mubr.f32.mxu0 0.0
      %898 = vmatmul.mubr.f32.gmra.mrb[0].mxu0 %v775
      %v899 = vpop.f32.mrb[0].mxu0
      %v900 = vadd.f32 %v703, %v899
      %v901 = vpop.f32.mrb[0].mxu0
      %902 = vmatprep.mubr.f32.mxu0 0.0
      %903 = vmatmul.mubr.f32.gmra.mrb[0].mxu0 %v778
      %v904 = vpop.f32.mrb[0].mxu0
      %v905 = vadd.f32 %v708, %v904
      %v906 = vpop.f32.mrb[0].mxu0
      %907 = vmatprep.mubr.f32.mxu0 0.0
      %908 = vmatmul.mubr.f32.gmra.mrb[0].mxu0 %v781
      %v909 = vpop.f32.mrb[0].mxu0
      %v910 = vadd.f32 %v713, %v909
      %v911 = vpop.f32.mrb[0].mxu0
      %912 = vmatprep.mubr.f32.mxu0 0.0
      %913 = vmatmul.mubr.f32.gmra.mrb[0].mxu0 %v784
      %v914 = vpop.f32.mrb[0].mxu0
      %v915 = vadd.f32 %v718, %v914
      %v916 = vpop.f32.mrb[0].mxu0
      %917 = vmatprep.mubr.f32.mxu0 0.0
      %918 = vmatmul.mubr.f32.gmra.mrb[0].mxu0 %v787
      %v919 = vpop.f32.mrb[0].mxu0
      %v920 = vadd.f32 %v723, %v919
      %v921 = vpop.f32.mrb[0].mxu0
      %922 = vmatprep.mubr.f32.mxu0 0.0
      %923 = vmatmul.mubr.f32.gmra.mrb[0].mxu0 %v790
      %v924 = vpop.f32.mrb[0].mxu0
      %v925 = vadd.f32 %v728, %v924
      %v926 = vpop.f32.mrb[0].mxu0
      %927 = vmatprep.mubr.f32.mxu0 0.0
      %928 = vmatmul.mubr.f32.gmra.mrb[0].mxu0 %v793
      %v929 = vpop.f32.mrb[0].mxu0
      %v930 = vadd.f32 %v733, %v929
      %v931 = vpop.f32.mrb[0].mxu0
      %932 = vmatprep.mubr.f32.mxu0 0.0
      %933 = vmatmul.mubr.f32.gmra.mrb[0].mxu0 %v796
      %v934 = vpop.f32.mrb[0].mxu0
      %v935 = vadd.f32 %v738, %v934
      %v936 = vpop.f32.mrb[0].mxu0
      %937 = vmatprep.mubr.f32.mxu0 0.0
      %938 = vmatmul.mubr.f32.gmra.mrb[0].mxu0 %v799
      %v939 = vpop.f32.mrb[0].mxu0
      %v940 = vadd.f32 %v743, %v939
      %v941 = vpop.f32.mrb[0].mxu0
      %942 = vmatprep.mubr.f32.mxu0 0.0
      %943 = vmatmul.mubr.f32.gmra.mrb[0].mxu0 %v802
      %v944 = vpop.f32.mrb[0].mxu0
      %v945 = vadd.f32 %v748, %v944
      %v946 = vpop.f32.mrb[0].mxu0
      %947 = vmatprep.mubr.f32.mxu0 0.0
      %948 = vmatmul.mubr.f32.gmra.mrb[0].mxu0 %v805
      %v949 = vpop.f32.mrb[0].mxu0
      %v950 = vadd.f32 %v753, %v949
      %v951 = vpop.f32.mrb[0].mxu0
      %952 = vmatprep.mubr.f32.mxu0 0.0
      %953 = vmatmul.mubr.f32.gmra.mrb[0].mxu0 %v808
      %v954 = vpop.f32.mrb[0].mxu0
      %v955 = vadd.f32 %v758, %v954
      %v956 = vpop.f32.mrb[0].mxu0
      %957 = vdwg.mxu0
      %v958 = vld [vmem:[%s496] sm:$0x1]
      %v960 = vlaneseq
      %v961 = vshrl.u32 %v960, 7
      %v962 = vsub.s32 0, %v961
      %v963 = vrot.slane %v958, %v962
      %v965 = vadd.f32 %v880, %v963
      %v966 = vadd.f32 %v885, %v963
      %v967 = vadd.f32 %v890, %v963
      %v968 = vadd.f32 %v895, %v963
      %v969 = vadd.f32 %v900, %v963
      %v970 = vadd.f32 %v905, %v963
      %v971 = vadd.f32 %v910, %v963
      %v972 = vadd.f32 %v915, %v963
      %v973 = vadd.f32 %v920, %v963
      %v974 = vadd.f32 %v925, %v963
      %v975 = vadd.f32 %v930, %v963
      %v976 = vadd.f32 %v935, %v963
      %v977 = vadd.f32 %v940, %v963
      %v978 = vadd.f32 %v945, %v963
      %v979 = vadd.f32 %v950, %v963
      %v980 = vadd.f32 %v955, %v963
      %v981 = vmax.f32 %v965, 0.0
      %v982 = vmax.f32 %v966, 0.0
      %v983 = vmax.f32 %v967, 0.0
      %v984 = vmax.f32 %v968, 0.0
      %v985 = vmax.f32 %v969, 0.0
      %v986 = vmax.f32 %v970, 0.0
      %v987 = vmax.f32 %v971, 0.0
      %v988 = vmax.f32 %v972, 0.0
      %v989 = vmax.f32 %v973, 0.0
      %v990 = vmax.f32 %v974, 0.0
      %v991 = vmax.f32 %v975, 0.0
      %v992 = vmax.f32 %v976, 0.0
      %v993 = vmax.f32 %v977, 0.0
      %v994 = vmax.f32 %v978, 0.0
      %v995 = vmax.f32 %v979, 0.0
      %v996 = vmax.f32 %v980, 0.0
      %v997 = vld [vmem:[%s503] sm:$0xff]
      %v998 = vld [vmem:[%s503 + $0x8] sm:$0xff]
      %v999 = vld [vmem:[%s503 + $0x10] sm:$0xff]
      %v1000 = vld [vmem:[%s503 + $0x18] sm:$0xff]
      %v1001 = vld [vmem:[%s508] sm:$0x1]
      %v1003 = vlaneseq
      %v1004 = vshrl.u32 %v1003, 7
      %v1005 = vsub.s32 0, %v1004
      %v1006 = vrot.slane %v1001, %v1005
      %vm1008 = vcmask 261120
      %v1010 = vsel %vm1008, %v981, 0
      %v1013 = vsel %vm1008, %v982, 0
      %v1016 = vsel %vm1008, %v983, 0
      %v1019 = vsel %vm1008, %v984, 0
      %v1022 = vsel %vm1008, %v985, 0
      %v1025 = vsel %vm1008, %v986, 0
      %v1028 = vsel %vm1008, %v987, 0
      %v1031 = vsel %vm1008, %v988, 0
      %v1034 = vsel %vm1008, %v989, 0
      %v1037 = vsel %vm1008, %v990, 0
      %v1040 = vsel %vm1008, %v991, 0
      %v1043 = vsel %vm1008, %v992, 0
      %v1046 = vsel %vm1008, %v993, 0
      %v1049 = vsel %vm1008, %v994, 0
      %v1052 = vsel %vm1008, %v995, 0
      %v1055 = vsel %vm1008, %v996, 0
      %1057 = vmatprep.subr.mxu0 0.0
      %1058 = vmatpush1.msra.mxu0 %v997
      %1059 = vmatprep.subr.mxu0 0.0
      %1060 = vmatpush1.msra.mxu0 %v998
      %1061 = vmatprep.subr.mxu0 0.0
      %1062 = vmatpush1.msra.mxu0 %v999
      %1063 = vmatprep.subr.mxu0 0.0
      %1064 = vmatpush1.msra.mxu0 %v1000
      %1065 = vmatprep.subr.mxu0 0.0
      %1066 = vmatpush1.msra.mxu0 0.0
      %1067 = vmatprep.subr.mxu0 0.0
      %1068 = vmatpush1.msra.mxu0 0.0
      %1069 = vmatprep.subr.mxu0 0.0
      %1070 = vmatpush1.msra.mxu0 0.0
      %1071 = vmatprep.subr.mxu0 0.0
      %1072 = vmatpush1.msra.mxu0 0.0
      %1073 = vmatprep.subr.mxu0 0.0
      %1074 = vmatpush1.msra.mxu0 0.0
      %1075 = vmatprep.subr.mxu0 0.0
      %1076 = vmatpush1.msra.mxu0 0.0
      %1077 = vmatprep.subr.mxu0 0.0
      %1078 = vmatpush1.msra.mxu0 0.0
      %1079 = vmatprep.subr.mxu0 0.0
      %1080 = vmatpush1.msra.mxu0 0.0
      %1081 = vmatprep.subr.mxu0 0.0
      %1082 = vmatpush1.msra.mxu0 0.0
      %1083 = vmatprep.subr.mxu0 0.0
      %1084 = vmatpush1.msra.mxu0 0.0
      %1085 = vmatprep.subr.mxu0 0.0
      %1086 = vmatpush1.msra.mxu0 0.0
      %1087 = vmatprep.subr.mxu0 0.0
      %1088 = vmatpush1.msra.mxu0 0.0
      %1089 = vmatprep.subr.mxu0 0.0
      %1090 = vmatpush1.msra.mxu0 0.0
      %1091 = vmatprep.subr.mxu0 0.0
      %1092 = vmatpush1.msra.mxu0 0.0
      %1093 = vmatprep.subr.mxu0 0.0
      %1094 = vmatpush1.msra.mxu0 0.0
      %1095 = vmatprep.subr.mxu0 0.0
      %1096 = vmatpush1.msra.mxu0 0.0
      %1097 = vmatprep.subr.mxu0 0.0
      %1098 = vmatpush1.msra.mxu0 0.0
      %1099 = vmatprep.subr.mxu0 0.0
      %1100 = vmatpush1.msra.mxu0 0.0
      %1101 = vmatprep.subr.mxu0 0.0
      %1102 = vmatpush1.msra.mxu0 0.0
      %1103 = vmatprep.subr.mxu0 0.0
      %1104 = vmatpush1.msra.mxu0 0.0
      %1105 = vmatprep.subr.mxu0 0.0
      %1106 = vmatpush1.msra.mxu0 0.0
      %1107 = vmatprep.subr.mxu0 0.0
      %1108 = vmatpush1.msra.mxu0 0.0
      %1109 = vmatprep.subr.mxu0 0.0
      %1110 = vmatpush1.msra.mxu0 0.0
      %1111 = vmatprep.subr.mxu0 0.0
      %1112 = vmatpush1.msra.mxu0 0.0
      %1113 = vmatprep.subr.mxu0 0.0
      %1114 = vmatpush1.msra.mxu0 0.0
      %1115 = vmatprep.subr.mxu0 0.0
      %1116 = vmatpush1.msra.mxu0 0.0
      %1117 = vmatprep.subr.mxu0 0.0
      %1118 = vmatpush1.msra.mxu0 0.0
      %1119 = vmatprep.subr.mxu0 0.0
      %1120 = vmatpush1.msra.mxu0 0.0
      %1121 = vmatprep.mubr.f32.mxu0 0.0
      %1122 = vmatmul.mubr.f32.gmra.mrb[0].mxu0 %v1010
      %v1123 = vpop.f32.mrb[0].mxu0
      %v1124 = vadd.f32 %v1006, %v1123
      %v1125 = vpop.f32.mrb[0].mxu0
      %1126 = vmatprep.mubr.f32.mxu0 0.0
      %1127 = vmatmul.mubr.f32.gmra.mrb[0].mxu0 %v1013
      %v1128 = vpop.f32.mrb[0].mxu0
      %v1129 = vadd.f32 %v1006, %v1128
      %v1130 = vpop.f32.mrb[0].mxu0
      %1131 = vmatprep.mubr.f32.mxu0 0.0
      %1132 = vmatmul.mubr.f32.gmra.mrb[0].mxu0 %v1016
      %v1133 = vpop.f32.mrb[0].mxu0
      %v1134 = vadd.f32 %v1006, %v1133
      %v1135 = vpop.f32.mrb[0].mxu0
      %1136 = vmatprep.mubr.f32.mxu0 0.0
      %1137 = vmatmul.mubr.f32.gmra.mrb[0].mxu0 %v1019
      %v1138 = vpop.f32.mrb[0].mxu0
      %v1139 = vadd.f32 %v1006, %v1138
      %v1140 = vpop.f32.mrb[0].mxu0
      %1141 = vmatprep.mubr.f32.mxu0 0.0
      %1142 = vmatmul.mubr.f32.gmra.mrb[0].mxu0 %v1022
      %v1143 = vpop.f32.mrb[0].mxu0
      %v1144 = vadd.f32 %v1006, %v1143
      %v1145 = vpop.f32.mrb[0].mxu0
      %1146 = vmatprep.mubr.f32.mxu0 0.0
      %1147 = vmatmul.mubr.f32.gmra.mrb[0].mxu0 %v1025
      %v1148 = vpop.f32.mrb[0].mxu0
      %v1149 = vadd.f32 %v1006, %v1148
      %v1150 = vpop.f32.mrb[0].mxu0
      %1151 = vmatprep.mubr.f32.mxu0 0.0
      %1152 = vmatmul.mubr.f32.gmra.mrb[0].mxu0 %v1028
      %v1153 = vpop.f32.mrb[0].mxu0
      %v1154 = vadd.f32 %v1006, %v1153
      %v1155 = vpop.f32.mrb[0].mxu0
      %1156 = vmatprep.mubr.f32.mxu0 0.0
      %1157 = vmatmul.mubr.f32.gmra.mrb[0].mxu0 %v1031
      %v1158 = vpop.f32.mrb[0].mxu0
      %v1159 = vadd.f32 %v1006, %v1158
      %v1160 = vpop.f32.mrb[0].mxu0
      %1161 = vmatprep.mubr.f32.mxu0 0.0
      %1162 = vmatmul.mubr.f32.gmra.mrb[0].mxu0 %v1034
      %v1163 = vpop.f32.mrb[0].mxu0
      %v1164 = vadd.f32 %v1006, %v1163
      %v1165 = vpop.f32.mrb[0].mxu0
      %1166 = vmatprep.mubr.f32.mxu0 0.0
      %1167 = vmatmul.mubr.f32.gmra.mrb[0].mxu0 %v1037
      %v1168 = vpop.f32.mrb[0].mxu0
      %v1169 = vadd.f32 %v1006, %v1168
      %v1170 = vpop.f32.mrb[0].mxu0
      %1171 = vmatprep.mubr.f32.mxu0 0.0
      %1172 = vmatmul.mubr.f32.gmra.mrb[0].mxu0 %v1040
      %v1173 = vpop.f32.mrb[0].mxu0
      %v1174 = vadd.f32 %v1006, %v1173
      %v1175 = vpop.f32.mrb[0].mxu0
      %1176 = vmatprep.mubr.f32.mxu0 0.0
      %1177 = vmatmul.mubr.f32.gmra.mrb[0].mxu0 %v1043
      %v1178 = vpop.f32.mrb[0].mxu0
      %v1179 = vadd.f32 %v1006, %v1178
      %v1180 = vpop.f32.mrb[0].mxu0
      %1181 = vmatprep.mubr.f32.mxu0 0.0
      %1182 = vmatmul.mubr.f32.gmra.mrb[0].mxu0 %v1046
      %v1183 = vpop.f32.mrb[0].mxu0
      %v1184 = vadd.f32 %v1006, %v1183
      %v1185 = vpop.f32.mrb[0].mxu0
      %1186 = vmatprep.mubr.f32.mxu0 0.0
      %1187 = vmatmul.mubr.f32.gmra.mrb[0].mxu0 %v1049
      %v1188 = vpop.f32.mrb[0].mxu0
      %v1189 = vadd.f32 %v1006, %v1188
      %v1190 = vpop.f32.mrb[0].mxu0
      %1191 = vmatprep.mubr.f32.mxu0 0.0
      %1192 = vmatmul.mubr.f32.gmra.mrb[0].mxu0 %v1052
      %v1193 = vpop.f32.mrb[0].mxu0
      %v1194 = vadd.f32 %v1006, %v1193
      %v1195 = vpop.f32.mrb[0].mxu0
      %1196 = vmatprep.mubr.f32.mxu0 0.0
      %1197 = vmatmul.mubr.f32.gmra.mrb[0].mxu0 %v1055
      %v1198 = vpop.f32.mrb[0].mxu0
      %v1199 = vadd.f32 %v1006, %v1198
      %v1200 = vpop.f32.mrb[0].mxu0
      %1201 = vdwg.mxu0
      %v1202 = vmax.f32 %v1124, 0.0
      %v1203 = vmax.f32 %v1129, 0.0
      %v1204 = vmax.f32 %v1134, 0.0
      %v1205 = vmax.f32 %v1139, 0.0
      %v1206 = vmax.f32 %v1144, 0.0
      %v1207 = vmax.f32 %v1149, 0.0
      %v1208 = vmax.f32 %v1154, 0.0
      %v1209 = vmax.f32 %v1159, 0.0
      %v1210 = vmax.f32 %v1164, 0.0
      %v1211 = vmax.f32 %v1169, 0.0
      %v1212 = vmax.f32 %v1174, 0.0
      %v1213 = vmax.f32 %v1179, 0.0
      %v1214 = vmax.f32 %v1184, 0.0
      %v1215 = vmax.f32 %v1189, 0.0
      %v1216 = vmax.f32 %v1194, 0.0
      %v1217 = vmax.f32 %v1199, 0.0
      %v1218 = vld [vmem:[%s515] sm:$0xff]
      %v1219 = vld [vmem:[%s515 + $0x8] sm:$0xff]
      %v1220 = vld [vmem:[%s515 + $0x10] sm:$0xff]
      %v1221 = vld [vmem:[%s515 + $0x18] sm:$0xff]
      %v1222 = vld [vmem:[%s520] sm:$0x1]
      %v1224 = vlaneseq
      %v1225 = vshrl.u32 %v1224, 7
      %v1226 = vsub.s32 0, %v1225
      %v1227 = vrot.slane %v1222, %v1226
      %v1230 = vsel %vm1008, %v1202, 0
      %v1233 = vsel %vm1008, %v1203, 0
      %v1236 = vsel %vm1008, %v1204, 0
      %v1239 = vsel %vm1008, %v1205, 0
      %v1242 = vsel %vm1008, %v1206, 0
      %v1245 = vsel %vm1008, %v1207, 0
      %v1248 = vsel %vm1008, %v1208, 0
      %v1251 = vsel %vm1008, %v1209, 0
      %v1254 = vsel %vm1008, %v1210, 0
      %v1257 = vsel %vm1008, %v1211, 0
      %v1260 = vsel %vm1008, %v1212, 0
      %v1263 = vsel %vm1008, %v1213, 0
      %v1266 = vsel %vm1008, %v1214, 0
      %v1269 = vsel %vm1008, %v1215, 0
      %v1272 = vsel %vm1008, %v1216, 0
      %v1275 = vsel %vm1008, %v1217, 0
      %1277 = vmatprep.subr.mxu0 0.0
      %1278 = vmatpush1.msra.mxu0 %v1218
      %1279 = vmatprep.subr.mxu0 0.0
      %1280 = vmatpush1.msra.mxu0 %v1219
      %1281 = vmatprep.subr.mxu0 0.0
      %1282 = vmatpush1.msra.mxu0 %v1220
      %1283 = vmatprep.subr.mxu0 0.0
      %1284 = vmatpush1.msra.mxu0 %v1221
      %1285 = vmatprep.subr.mxu0 0.0
      %1286 = vmatpush1.msra.mxu0 0.0
      %1287 = vmatprep.subr.mxu0 0.0
      %1288 = vmatpush1.msra.mxu0 0.0
      %1289 = vmatprep.subr.mxu0 0.0
      %1290 = vmatpush1.msra.mxu0 0.0
      %1291 = vmatprep.subr.mxu0 0.0
      %1292 = vmatpush1.msra.mxu0 0.0
      %1293 = vmatprep.subr.mxu0 0.0
      %1294 = vmatpush1.msra.mxu0 0.0
      %1295 = vmatprep.subr.mxu0 0.0
      %1296 = vmatpush1.msra.mxu0 0.0
      %1297 = vmatprep.subr.mxu0 0.0
      %1298 = vmatpush1.msra.mxu0 0.0
      %1299 = vmatprep.subr.mxu0 0.0
      %1300 = vmatpush1.msra.mxu0 0.0
      %1301 = vmatprep.subr.mxu0 0.0
      %1302 = vmatpush1.msra.mxu0 0.0
      %1303 = vmatprep.subr.mxu0 0.0
      %1304 = vmatpush1.msra.mxu0 0.0
      %1305 = vmatprep.subr.mxu0 0.0
      %1306 = vmatpush1.msra.mxu0 0.0
      %1307 = vmatprep.subr.mxu0 0.0
      %1308 = vmatpush1.msra.mxu0 0.0
      %1309 = vmatprep.subr.mxu0 0.0
      %1310 = vmatpush1.msra.mxu0 0.0
      %1311 = vmatprep.subr.mxu0 0.0
      %1312 = vmatpush1.msra.mxu0 0.0
      %1313 = vmatprep.subr.mxu0 0.0
      %1314 = vmatpush1.msra.mxu0 0.0
      %1315 = vmatprep.subr.mxu0 0.0
      %1316 = vmatpush1.msra.mxu0 0.0
      %1317 = vmatprep.subr.mxu0 0.0
      %1318 = vmatpush1.msra.mxu0 0.0
      %1319 = vmatprep.subr.mxu0 0.0
      %1320 = vmatpush1.msra.mxu0 0.0
      %1321 = vmatprep.subr.mxu0 0.0
      %1322 = vmatpush1.msra.mxu0 0.0
      %1323 = vmatprep.subr.mxu0 0.0
      %1324 = vmatpush1.msra.mxu0 0.0
      %1325 = vmatprep.subr.mxu0 0.0
      %1326 = vmatpush1.msra.mxu0 0.0
      %1327 = vmatprep.subr.mxu0 0.0
      %1328 = vmatpush1.msra.mxu0 0.0
      %1329 = vmatprep.subr.mxu0 0.0
      %1330 = vmatpush1.msra.mxu0 0.0
      %1331 = vmatprep.subr.mxu0 0.0
      %1332 = vmatpush1.msra.mxu0 0.0
      %1333 = vmatprep.subr.mxu0 0.0
      %1334 = vmatpush1.msra.mxu0 0.0
      %1335 = vmatprep.subr.mxu0 0.0
      %1336 = vmatpush1.msra.mxu0 0.0
      %1337 = vmatprep.subr.mxu0 0.0
      %1338 = vmatpush1.msra.mxu0 0.0
      %1339 = vmatprep.subr.mxu0 0.0
      %1340 = vmatpush1.msra.mxu0 0.0
      %1341 = vmatprep.mubr.f32.mxu0 0.0
      %1342 = vmatmul.mubr.f32.gmra.mrb[0].mxu0 %v1230
      %v1343 = vpop.f32.mrb[0].mxu0
      %v1344 = vadd.f32 %v1227, %v1343
      %v1345 = vpop.f32.mrb[0].mxu0
      %1346 = vmatprep.mubr.f32.mxu0 0.0
      %1347 = vmatmul.mubr.f32.gmra.mrb[0].mxu0 %v1233
      %v1348 = vpop.f32.mrb[0].mxu0
      %v1349 = vadd.f32 %v1227, %v1348
      %v1350 = vpop.f32.mrb[0].mxu0
      %1351 = vmatprep.mubr.f32.mxu0 0.0
      %1352 = vmatmul.mubr.f32.gmra.mrb[0].mxu0 %v1236
      %v1353 = vpop.f32.mrb[0].mxu0
      %v1354 = vadd.f32 %v1227, %v1353
      %v1355 = vpop.f32.mrb[0].mxu0
      %1356 = vmatprep.mubr.f32.mxu0 0.0
      %1357 = vmatmul.mubr.f32.gmra.mrb[0].mxu0 %v1239
      %v1358 = vpop.f32.mrb[0].mxu0
      %v1359 = vadd.f32 %v1227, %v1358
      %v1360 = vpop.f32.mrb[0].mxu0
      %1361 = vmatprep.mubr.f32.mxu0 0.0
      %1362 = vmatmul.mubr.f32.gmra.mrb[0].mxu0 %v1242
      %v1363 = vpop.f32.mrb[0].mxu0
      %v1364 = vadd.f32 %v1227, %v1363
      %v1365 = vpop.f32.mrb[0].mxu0
      %1366 = vmatprep.mubr.f32.mxu0 0.0
      %1367 = vmatmul.mubr.f32.gmra.mrb[0].mxu0 %v1245
      %v1368 = vpop.f32.mrb[0].mxu0
      %v1369 = vadd.f32 %v1227, %v1368
      %v1370 = vpop.f32.mrb[0].mxu0
      %1371 = vmatprep.mubr.f32.mxu0 0.0
      %1372 = vmatmul.mubr.f32.gmra.mrb[0].mxu0 %v1248
      %v1373 = vpop.f32.mrb[0].mxu0
      %v1374 = vadd.f32 %v1227, %v1373
      %v1375 = vpop.f32.mrb[0].mxu0
      %1376 = vmatprep.mubr.f32.mxu0 0.0
      %1377 = vmatmul.mubr.f32.gmra.mrb[0].mxu0 %v1251
      %v1378 = vpop.f32.mrb[0].mxu0
      %v1379 = vadd.f32 %v1227, %v1378
      %v1380 = vpop.f32.mrb[0].mxu0
      %1381 = vmatprep.mubr.f32.mxu0 0.0
      %1382 = vmatmul.mubr.f32.gmra.mrb[0].mxu0 %v1254
      %v1383 = vpop.f32.mrb[0].mxu0
      %v1384 = vadd.f32 %v1227, %v1383
      %v1385 = vpop.f32.mrb[0].mxu0
      %1386 = vmatprep.mubr.f32.mxu0 0.0
      %1387 = vmatmul.mubr.f32.gmra.mrb[0].mxu0 %v1257
      %v1388 = vpop.f32.mrb[0].mxu0
      %v1389 = vadd.f32 %v1227, %v1388
      %v1390 = vpop.f32.mrb[0].mxu0
      %1391 = vmatprep.mubr.f32.mxu0 0.0
      %1392 = vmatmul.mubr.f32.gmra.mrb[0].mxu0 %v1260
      %v1393 = vpop.f32.mrb[0].mxu0
      %v1394 = vadd.f32 %v1227, %v1393
      %v1395 = vpop.f32.mrb[0].mxu0
      %1396 = vmatprep.mubr.f32.mxu0 0.0
      %1397 = vmatmul.mubr.f32.gmra.mrb[0].mxu0 %v1263
      %v1398 = vpop.f32.mrb[0].mxu0
      %v1399 = vadd.f32 %v1227, %v1398
      %v1400 = vpop.f32.mrb[0].mxu0
      %1401 = vmatprep.mubr.f32.mxu0 0.0
      %1402 = vmatmul.mubr.f32.gmra.mrb[0].mxu0 %v1266
      %v1403 = vpop.f32.mrb[0].mxu0
      %v1404 = vadd.f32 %v1227, %v1403
      %v1405 = vpop.f32.mrb[0].mxu0
      %1406 = vmatprep.mubr.f32.mxu0 0.0
      %1407 = vmatmul.mubr.f32.gmra.mrb[0].mxu0 %v1269
      %v1408 = vpop.f32.mrb[0].mxu0
      %v1409 = vadd.f32 %v1227, %v1408
      %v1410 = vpop.f32.mrb[0].mxu0
      %1411 = vmatprep.mubr.f32.mxu0 0.0
      %1412 = vmatmul.mubr.f32.gmra.mrb[0].mxu0 %v1272
      %v1413 = vpop.f32.mrb[0].mxu0
      %v1414 = vadd.f32 %v1227, %v1413
      %v1415 = vpop.f32.mrb[0].mxu0
      %1416 = vmatprep.mubr.f32.mxu0 0.0
      %1417 = vmatmul.mubr.f32.gmra.mrb[0].mxu0 %v1275
      %v1418 = vpop.f32.mrb[0].mxu0
      %v1419 = vadd.f32 %v1227, %v1418
      %v1420 = vpop.f32.mrb[0].mxu0
      %1421 = vdwg.mxu0
      %1422 = vst.msk [vmem:[%s526] sm:$0xff] %vm761, %v1344
      %1423 = vst.msk [vmem:[%s526 + $0x8] sm:$0xff] %vm761, %v1349
      %1424 = vst.msk [vmem:[%s526 + $0x10] sm:$0xff] %vm761, %v1354
      %1425 = vst.msk [vmem:[%s526 + $0x18] sm:$0xff] %vm761, %v1359
      %1426 = vst.msk [vmem:[%s526 + $0x20] sm:$0xff] %vm761, %v1364
      %1427 = vst.msk [vmem:[%s526 + $0x28] sm:$0xff] %vm761, %v1369
      %1428 = vst.msk [vmem:[%s526 + $0x30] sm:$0xff] %vm761, %v1374
      %1429 = vst.msk [vmem:[%s526 + $0x38] sm:$0xff] %vm761, %v1379
      %1430 = vst.msk [vmem:[%s526 + $0x40] sm:$0xff] %vm761, %v1384
      %1431 = vst.msk [vmem:[%s526 + $0x48] sm:$0xff] %vm761, %v1389
      %1432 = vst.msk [vmem:[%s526 + $0x50] sm:$0xff] %vm761, %v1394
      %1433 = vst.msk [vmem:[%s526 + $0x58] sm:$0xff] %vm761, %v1399
      %1434 = vst.msk [vmem:[%s526 + $0x60] sm:$0xff] %vm761, %v1404
      %1435 = vst.msk [vmem:[%s526 + $0x68] sm:$0xff] %vm761, %v1409
      %1436 = vst.msk [vmem:[%s526 + $0x70] sm:$0xff] %vm761, %v1414
      %1437 = vst.msk [vmem:[%s526 + $0x78] sm:$0xff] %vm761, %v1419
      %s1438 = smul.u32 16, %s22
      %p1439 = scmp.lt.s32.totalorder %s1438, 31
      %s1440 = scalar_select %p1439, %s1438, 31
      %s1441 = smul.addr %s1440, 8
      %s1442 = scalar_lea.vmem %s10, %s1441
      // Predicated region
      $region57: #{tpu_custom_call.1} parent=55 // pred_check
        %p1443 = pneg %p288
      $region58: #{tpu_custom_call.1} parent=55 // pred_check_branch
        %1445 = sbr.rel (%p1443) target = $region60
      $region59: #{tpu_custom_call.1} parent=55 // pred_region
        %s1446 = smul.u32 16, %s22
      $region60: #{tpu_custom_call.1} parent=55 // pred_fallthru
        _
    $region56: #{tpu_custom_call.1} parent=5 // pred_fallthru
      _
    %p1447 = scmp.le.s32.totalorder 2, %s17
    // Predicated region
    $region61: #{tpu_custom_call.1} parent=5 // pred_check
      %p1448 = pneg %p1447
    $region62: #{tpu_custom_call.1} parent=5 // pred_check_branch
      %1450 = sbr.rel (%p1448) target = $region64
    $region63: #{tpu_custom_call.1} parent=5 // pred_region
      %s1451 = ssub.s32 %s17, 2
      // Predicated region
      $region65: #{tpu_custom_call.1} parent=63 // pred_check
        %p1452 = pneg %p294
      $region66: #{tpu_custom_call.1} parent=63 // pred_check_branch
        %1454 = sbr.rel (%p1452) target = $region68
      $region67: #{tpu_custom_call.1} parent=63 // pred_region
        %s1455 = smul.u32 16, %s23
        %p1456 = scmp.lt.s32.totalorder %s1455, 31
        %s1457 = scalar_select %p1456, %s1455, 31
        %s1458 = smul.addr %s1457, 8
        %s1459 = scalar_lea.vmem %s10, %s1458
      $region68: #{tpu_custom_call.1} parent=63 // pred_fallthru
        _
    $region64: #{tpu_custom_call.1} parent=5 // pred_fallthru
      _
  $region6: #{tpu_custom_call.1} parent=0 // loop_footer
    %s21 = sadd.s32 1, %s17
  $region7: #{tpu_custom_call.1} parent=0 // loop_footer_branch
    %16 = sbr.rel target = $region3
  $region8: #{tpu_custom_call.1} parent=0 // loop_exit
    _

</llo_original>
